<compile_context>
chip_gen: v5e
topology: v5e:2x2
jax: 0.10.0
libtpu: 0.0.40
codegen_flags: <defaults>
</compile_context>

<pallas_src>
import numpy as np
import jax
import jax.numpy as jnp
from jax.experimental import pallas as pl
from jax.experimental.pallas import tpu as pltpu


def _round_up(x, m):
    return (x + m - 1) // m * m


# ---------------------------------------------------------------------------
# Kernel 1: GRU + attention -> session representation projected by b.T (B, E)
# ---------------------------------------------------------------------------
def narm_session_kernel(x_ref, mask_ref, wi_ref, wh_ref, bi_ref, bnh_ref,
                        a1t_ref, a2t_ref, v_ref, bt_ref,
                        sess_ref,
                        gi_s, hseq_s):
    L, TB, Hp3 = gi_s.shape
    Hp = Hp3 // 3

    # ---- hoisted input projection: one big MXU contraction, all gates fused --
    gi_s[...] = (jnp.einsum('lbe,eg->lbg', x_ref[...], wi_ref[...],
                            preferred_element_type=jnp.float32)
                 + bi_ref[...])

    wh = wh_ref[...]                                        # (Hp, 3Hp), resident
    bnh = jnp.broadcast_to(bnh_ref[...], (TB, Hp))          # hoisted broadcast

    # ---- masked GRU recurrence (PyTorch gate order r, z, n) ------------------
    def gru_step(t, h_prev):
        gi_t = gi_s[t]                                      # (TB, 3Hp), free [t] index
        m_t = mask_ref[t]                                   # (TB, 1)
        gh = jnp.dot(h_prev, wh, preferred_element_type=jnp.float32)  # fused MXU push
        r = jax.nn.sigmoid(gi_t[:, :Hp] + gh[:, :Hp])
        z = jax.nn.sigmoid(gi_t[:, Hp:2 * Hp] + gh[:, Hp:2 * Hp])
        n = jnp.tanh(gi_t[:, 2 * Hp:] + r * (gh[:, 2 * Hp:] + bnh))
        h_new = n + z * (h_prev - n)                        # == (1-z)*n + z*h_prev
        hseq_s[t] = m_t * h_new                             # padded GRU output rows -> 0
        return h_prev + m_t * (h_new - h_prev)              # carry advances only on valid steps

    unroll = True if L <= 16 else 8
    h_last = jax.lax.fori_loop(0, L, gru_step,
                               jnp.zeros((TB, Hp), jnp.float32), unroll=unroll)

    # ---- attention: q = sigmoid(h_t @ a1.T + h @ a2.T) . v -------------------
    c_g = h_last                                            # (TB, Hp) == h_t.squeeze(1)
    h_all = hseq_s[...]                                     # (L, TB, Hp) padded GRU outputs
    mask3 = mask_ref[...]                                   # (L, TB, 1)

    term1 = jnp.dot(c_g, a1t_ref[...], preferred_element_type=jnp.float32)
    term2 = jnp.einsum('lbh,hk->lbk', h_all, a2t_ref[...],
                       preferred_element_type=jnp.float32)  # (L, TB, Hp)
    sig = jax.nn.sigmoid(term1[None, :, :] + term2)
    # q = sig @ v wastes 127/128 MXU lanes; use a VPU multiply + lane reduce.
    q = jnp.sum(sig * v_ref[...], axis=-1, keepdims=True)   # (L, TB, 1)

    # Max-subtracted masked softmax over time, exact normalization.  Fully
    # padded rows (e.g. batch-padding rows) fall back to alpha = 0.
    valid_any = jnp.sum(mask3, axis=0, keepdims=True) > 0.0
    q_max = jnp.max(jnp.where(mask3 > 0.0, q, -1e30), axis=0, keepdims=True)
    q_max = jnp.where(valid_any, q_max, 0.0)
    ealpha = jnp.exp(jnp.where(mask3 > 0.0, q - q_max, -1e30))
    den = jnp.sum(ealpha, axis=0, keepdims=True)
    alpha = ealpha / jnp.where(valid_any, den, 1.0)
    c_l = jnp.sum(alpha * h_all, axis=0)                    # (TB, Hp)

    c = jnp.concatenate([c_g, c_l], axis=1)                 # (TB, 2Hp)
    sess = jnp.dot(c, bt_ref[...], preferred_element_type=jnp.float32)   # (TB, E)
    sess_ref[...] = sess.astype(sess_ref.dtype)


# ---------------------------------------------------------------------------
# Kernel 2: vocab-tiled scoring s = sess @ emb.T
# ---------------------------------------------------------------------------
def narm_score_kernel(sess_ref, emb_ref, out_ref):
    out_ref[...] = jnp.dot(sess_ref[...], emb_ref[...],
                           preferred_element_type=jnp.float32).astype(out_ref.dtype)


# ---------------------------------------------------------------------------
# One-time parameter preparation (runs once, outside the per-call forward)
# ---------------------------------------------------------------------------
def prepare_narm(params, *, scoring_dtype=jnp.bfloat16, tile_v=4096):
    emb_w = params['emb_weight']                 # (V, E), row 0 zero (padding_idx=0)
    V, E = emb_w.shape
    H = params['w_hh'].shape[1]
    Hp = _round_up(H, 128)                       # 128-lane-aligned per-gate block

    w_ih, w_hh = params['w_ih'], params['w_hh']  # (3H, E), (3H, H)
    b_ih, b_hh = params['b_ih'], params['b_hh']  # (3H,)

    def gate(w, g):
        return w[g * H:(g + 1) * H]

    def padc(m):                                 # pad gate (lane) dim H -> Hp
        return jnp.pad(m, ((0, 0), (0, Hp - H)))

    def padv(b):
        return jnp.pad(b, (0, Hp - H))

    # Fused input projection (E, 3Hp), fused hidden projection (Hp, 3Hp).
    wi = jnp.concatenate([padc(gate(w_ih, g).T) for g in range(3)], axis=1)
    wh = jnp.concatenate(
        [jnp.pad(gate(w_hh, g).T, ((0, Hp - H), (0, Hp - H))) for g in range(3)],
        axis=1)
    # Input-side biases, with r/z hidden-side biases folded in (GRU semantics).
    bi = jnp.concatenate([padv(b_ih[:H] + b_hh[:H]),
                          padv(b_ih[H:2 * H] + b_hh[H:2 * H]),
                          padv(b_ih[2 * H:])])[None, :]          # (1, 3Hp)
    bnh = padv(b_hh[2 * H:])[None, :]                            # (1, Hp)

    a1t = jnp.pad(params['a1'].T, ((0, Hp - H), (0, Hp - H)))    # (Hp, Hp)
    a2t = jnp.pad(params['a2'].T, ((0, Hp - H), (0, Hp - H)))
    v = jnp.pad(params['v'].T, ((0, 0), (0, Hp - H)))            # (1, Hp)

    b = params['b']                                              # (E, 2H)
    bt = jnp.zeros((2 * Hp, E), jnp.float32)
    bt = bt.at[:H].set(b[:, :H].T)
    bt = bt.at[Hp:Hp + H].set(b[:, H:].T)

    # Scoring table: transpose + cast + pad done ONCE here, never per call.
    tile_v = _round_up(max(128, min(tile_v, _round_up(V, 128))), 128)
    v_pad = _round_up(V, tile_v)
    emb_t = jnp.pad(emb_w.T, ((0, 0), (0, v_pad - V))).astype(scoring_dtype)  # (E, V_pad)

    return dict(
        emb_gather=emb_w,
        wi=wi.astype(scoring_dtype), wh=wh, bi=bi, bnh=bnh,
        a1t=a1t, a2t=a2t, v=v, bt=bt,
        emb_t=emb_t,
        V=V, E=E, H=H, Hp=Hp, tile_v=tile_v,
        scoring_dtype=scoring_dtype,
    )


# ---------------------------------------------------------------------------
# Per-call forward
# ---------------------------------------------------------------------------
def narm_forward(ids, prep, *, tile_b=64, score_out_dtype=jnp.float32):
    """ids: (B, L) int item-history ids, right-padded with 0.

    score_out_dtype: use jnp.bfloat16 for large production batches to halve
    the score writeback traffic of the (memory-bound) scoring kernel.
    """
    B, L = ids.shape
    E, Hp, V = prep['E'], prep['Hp'], prep['V']
    tile_v = prep['tile_v']
    cdt = prep['scoring_dtype']
    Hp3 = 3 * Hp

    # Pad batch to a sublane/tile_b multiple.  Padded rows have all-zero ids,
    # are fully masked inside the kernel, and are sliced off at the end.
    tile_b = max(8, _round_up(min(tile_b, max(B, 1)), 8))
    B_pad = _round_up(max(B, tile_b), tile_b)

    ids_p = jnp.pad(ids.astype(jnp.int32), ((0, B_pad - B), (0, 0)))
    x = jnp.take(prep['emb_gather'], ids_p, axis=0)           # (B_pad, L, E); emb_dropout = identity (eval)
    x_t = jnp.transpose(x, (1, 0, 2)).astype(cdt)             # (L, B_pad, E); bf16 halves kernel-1 DMA
    mask_t = (ids_p != 0).T[:, :, None].astype(jnp.float32)   # (L, B_pad, 1)

    grid_b = B_pad // tile_b
    const = lambda shape: pl.BlockSpec(shape, lambda i: (0,) * len(shape))
    sess = pl.pallas_call(
        narm_session_kernel,
        out_shape=jax.ShapeDtypeStruct((B_pad, E), cdt),
        grid=(grid_b,),
        in_specs=[pl.BlockSpec((L, tile_b, E), lambda i: (0, i, 0)),   # x (time-major)
                  pl.BlockSpec((L, tile_b, 1), lambda i: (0, i, 0)),   # mask
                  const((E, Hp3)),                                     # fused W_i
                  const((Hp, Hp3)),                                    # fused W_h
                  const((1, Hp3)),                                     # folded input-side biases
                  const((1, Hp)),                                      # hidden-side n bias
                  const((Hp, Hp)), const((Hp, Hp)),                    # a1.T, a2.T
                  const((1, Hp)),                                      # v.T
                  const((2 * Hp, E))],                                 # b.T
        out_specs=pl.BlockSpec((tile_b, E), lambda i: (i, 0)),
        scratch_shapes=[pltpu.VMEM((L, tile_b, Hp3), jnp.float32),     # fused gate projections
                        pltpu.VMEM((L, tile_b, Hp), jnp.float32)],     # padded GRU outputs
        compiler_params=pltpu.CompilerParams(
            dimension_semantics=("parallel",),    # v7x: batch blocks split across the 2 TCs
            vmem_limit_bytes=32 * 1024 * 1024),
    )(x_t, mask_t, prep['wi'], prep['wh'], prep['bi'], prep['bnh'],
      prep['a1t'], prep['a2t'], prep['v'], prep['bt'])
    # TODO(synk): for v7x production shapes (64 MiB VMEM) re-budget kernel-1
    # scratch: bf16 gate scratch and/or smaller tile_b.

    v_pad = prep['emb_t'].shape[1]
    s = pl.pallas_call(
        narm_score_kernel,
        out_shape=jax.ShapeDtypeStruct((B_pad, v_pad), score_out_dtype),
        grid=(v_pad // tile_v,),
        in_specs=[pl.BlockSpec((B_pad, E), lambda j: (0, 0)),
                  # TODO(synk): add pipeline_mode=pl.Buffered(3) here if an
                  # xprof trace on v6e still shows exposed DMA at this tile_v.
                  pl.BlockSpec((E, tile_v), lambda j: (0, j))],
        out_specs=pl.BlockSpec((B_pad, tile_v), lambda j: (0, j)),
        compiler_params=pltpu.CompilerParams(
            dimension_semantics=("parallel",),    # vocab tiles are independent
            vmem_limit_bytes=32 * 1024 * 1024),
    )(sess, prep['emb_t'])
    return s[:B, :V]


# ---------------------------------------------------------------------------
# Plain-JAX f32 reference of the PyTorch forward (eval mode)
# ---------------------------------------------------------------------------
def narm_reference(ids, params):
    emb_w = params['emb_weight']
    B, _ = ids.shape
    H = params['w_hh'].shape[1]
    x = emb_w[ids]                                   # (B, L, E)
    mask = (ids != 0).astype(jnp.float32)            # (B, L)

    def step(h_prev, inp):
        x_t, m_t = inp
        gi = x_t @ params['w_ih'].T + params['b_ih']
        gh = h_prev @ params['w_hh'].T + params['b_hh']
        r = jax.nn.sigmoid(gi[:, :H] + gh[:, :H])
        z = jax.nn.sigmoid(gi[:, H:2 * H] + gh[:, H:2 * H])
        n = jnp.tanh(gi[:, 2 * H:] + r * gh[:, 2 * H:])
        h_new = (1.0 - z) * n + z * h_prev
        m = m_t[:, None]
        return m * h_new + (1.0 - m) * h_prev, m * h_new

    h_last, h_seq = jax.lax.scan(step, jnp.zeros((B, H), jnp.float32),
                                 (jnp.transpose(x, (1, 0, 2)), mask.T))
    h = jnp.transpose(h_seq, (1, 0, 2))              # (B, L, H)
    c_g = h_last
    q = jax.nn.sigmoid(c_g[:, None, :] @ params['a1'].T
                       + h @ params['a2'].T) @ params['v']
    alpha = jnp.exp(q) * mask[:, :, None]
    alpha = alpha / alpha.sum(axis=1, keepdims=True)
    c_l = (alpha * h).sum(axis=1)
    c = jnp.concatenate([c_g, c_l], axis=1)
    return c @ params['b'].T @ emb_w.T


if __name__ == "__main__":
    B, L, V, E, H = 2, 8, 1024, 16, 32

    key = jax.random.PRNGKey(0)
    ks = jax.random.split(key, 10)

    lim = 1.0 / np.sqrt(H)
    emb_weight = jax.random.normal(ks[0], (V, E), jnp.float32)
    emb_weight = emb_weight.at[0].set(0.0)           # padding_idx=0 row
    params = {
        'emb_weight': emb_weight,
        'w_ih': jax.random.uniform(ks[1], (3 * H, E), jnp.float32, -lim, lim),
        'w_hh': jax.random.uniform(ks[2], (3 * H, H), jnp.float32, -lim, lim),
        'b_ih': jax.random.uniform(ks[3], (3 * H,), jnp.float32, -lim, lim),
        'b_hh': jax.random.uniform(ks[4], (3 * H,), jnp.float32, -lim, lim),
        'a1': jax.random.normal(ks[5], (H, H), jnp.float32),
        'a2': jax.random.normal(ks[6], (H, H), jnp.float32),
        'v': jax.random.normal(ks[7], (H, 1), jnp.float32),
        'b': jax.random.normal(ks[8], (E, 2 * H), jnp.float32),
    }

    # Item history ids, right-padded with zeros; max length == L so the original
    # PyTorch broadcasting (value_mask vs padded h) is well defined.
    ids = jax.random.randint(ks[9], (B, L), 1, V).astype(jnp.int32)
    lengths = np.array([L, 5])
    pad = np.arange(L)[None, :] >= lengths[:, None]
    ids = jnp.where(jnp.asarray(pad), 0, ids)

    s_ref = np.asarray(narm_reference(ids, params))
    scale = float(np.max(np.abs(s_ref)))

    # f32 end-to-end path: tight check against the PyTorch-semantics reference.
    prep_f32 = prepare_narm(params, scoring_dtype=jnp.float32)
    s_f32 = jax.block_until_ready(narm_forward(ids, prep_f32))
    np.testing.assert_allclose(np.asarray(s_f32), s_ref,
                               rtol=5e-3, atol=5e-3 * scale)

    # Default bf16 path: bf16 embedding table / session vector in the scoring
    # matmul AND bf16 GRU input projection (f32 MXU accumulation everywhere).
    prep_bf16 = prepare_narm(params)
    s_bf16 = jax.block_until_ready(narm_forward(ids, prep_bf16))
    np.testing.assert_allclose(np.asarray(s_bf16), s_ref,
                               rtol=3e-2, atol=3e-2 * scale)

    print("KERNEL_OK")
</pallas_src>

<mosaic_0001>
module attributes {stable_mosaic.version = 11 : i64} {
  func.func @narm_session_kernel(%arg0: i32, %arg1: memref<8x8x16xf32, #tpu.memory_space<vmem>>, %arg2: memref<8x8x1xf32, #tpu.memory_space<vmem>>, %arg3: memref<16x384xf32, #tpu.memory_space<vmem>>, %arg4: memref<128x384xf32, #tpu.memory_space<vmem>>, %arg5: memref<1x384xf32, #tpu.memory_space<vmem>>, %arg6: memref<1x128xf32, #tpu.memory_space<vmem>>, %arg7: memref<128x128xf32, #tpu.memory_space<vmem>>, %arg8: memref<128x128xf32, #tpu.memory_space<vmem>>, %arg9: memref<1x128xf32, #tpu.memory_space<vmem>>, %arg10: memref<256x16xf32, #tpu.memory_space<vmem>>, %arg11: memref<8x16xf32, #tpu.memory_space<vmem>>, %arg12: memref<8x8x384xf32, #tpu.memory_space<vmem>>, %arg13: memref<8x8x128xf32, #tpu.memory_space<vmem>>) attributes {dimension_semantics = [#tpu.dimension_semantics<parallel>], iteration_bounds = array<i64: 1>, scalar_prefetch = 0 : i64, scratch_operands = 2 : i64, tpu.core_type = #tpu.core_type<tc>, window_params = [{transform_indices = @transform_0, window_bounds = array<i64: 8, 8, 16>}, {transform_indices = @transform_1, window_bounds = array<i64: 8, 8, 1>}, {pipeline_mode = #tpu.pipeline_mode<synchronous>, transform_indices = @transform_2, window_bounds = array<i64: 16, 384>}, {pipeline_mode = #tpu.pipeline_mode<synchronous>, transform_indices = @transform_3, window_bounds = array<i64: 128, 384>}, {pipeline_mode = #tpu.pipeline_mode<synchronous>, transform_indices = @transform_4, window_bounds = array<i64: 1, 384>}, {pipeline_mode = #tpu.pipeline_mode<synchronous>, transform_indices = @transform_5, window_bounds = array<i64: 1, 128>}, {pipeline_mode = #tpu.pipeline_mode<synchronous>, transform_indices = @transform_6, window_bounds = array<i64: 128, 128>}, {pipeline_mode = #tpu.pipeline_mode<synchronous>, transform_indices = @transform_7, window_bounds = array<i64: 128, 128>}, {pipeline_mode = #tpu.pipeline_mode<synchronous>, transform_indices = @transform_8, window_bounds = array<i64: 1, 128>}, {pipeline_mode = #tpu.pipeline_mode<synchronous>, transform_indices = @transform_9, window_bounds = array<i64: 256, 16>}, {transform_indices = @transform_10, window_bounds = array<i64: 8, 16>}]} {
    %c0 = arith.constant 0 : index
    %c0_0 = arith.constant 0 : index
    %c0_1 = arith.constant 0 : index
    %0 = vector.load %arg1[%c0, %c0_0, %c0_1] : memref<8x8x16xf32, #tpu.memory_space<vmem>>, vector<8x8x16xf32>
    %c0_2 = arith.constant 0 : index
    %c0_3 = arith.constant 0 : index
    %1 = vector.load %arg3[%c0_2, %c0_3] : memref<16x384xf32, #tpu.memory_space<vmem>>, vector<16x384xf32>
    "tpu.trace_start"() <{level = 10 : i32, message = "lbe,eg->lbg"}> : () -> ()
    %cst = arith.constant dense<0.000000e+00> : vector<8x8x384xf32>
    %2 = tpu.matmul %0, %1, %cst {dimension_numbers = #tpu.dot_dimension_numbers<[2], [0], [0, 1], [1], [0, 0, 0, 1, 1, 1], [], []>} : vector<8x8x16xf32>, vector<16x384xf32>, vector<8x8x384xf32> -> vector<8x8x384xf32>
    "tpu.trace_stop"() : () -> ()
    %c0_4 = arith.constant 0 : index
    %c0_5 = arith.constant 0 : index
    %3 = vector.load %arg5[%c0_4, %c0_5] : memref<1x384xf32, #tpu.memory_space<vmem>>, vector<1x384xf32>
    %4 = vector.shape_cast %3 : vector<1x384xf32> to vector<1x1x384xf32>
    %5 = vector.broadcast %4 : vector<1x1x384xf32> to vector<8x8x384xf32>
    %6 = arith.addf %2, %5 : vector<8x8x384xf32>
    %c0_6 = arith.constant 0 : index
    %c0_7 = arith.constant 0 : index
    %c0_8 = arith.constant 0 : index
    %7 = vector.load %arg12[%c0_6, %c0_7, %c0_8] : memref<8x8x384xf32, #tpu.memory_space<vmem>>, vector<8x8x384xf32>
    tpu.vector_store %arg12[%c0_6, %c0_7, %c0_8], %6 {strides = array<i32>} : memref<8x8x384xf32, #tpu.memory_space<vmem>>, vector<8x8x384xf32>,
    %c0_9 = arith.constant 0 : index
    %c0_10 = arith.constant 0 : index
    %8 = vector.load %arg4[%c0_9, %c0_10] : memref<128x384xf32, #tpu.memory_space<vmem>>, vector<128x384xf32>
    %c0_11 = arith.constant 0 : index
    %c0_12 = arith.constant 0 : index
    %9 = vector.load %arg6[%c0_11, %c0_12] : memref<1x128xf32, #tpu.memory_space<vmem>>, vector<1x128xf32>
    %10 = vector.shape_cast %9 : vector<1x128xf32> to vector<1x128xf32>
    %11 = vector.broadcast %10 : vector<1x128xf32> to vector<8x128xf32>
    %cst_13 = arith.constant 0.000000e+00 : f32
    %12 = vector.broadcast %cst_13 : f32 to vector<8x128xf32>
    %c0_i32 = arith.constant 0 : i32
    %13 = arith.index_cast %c0_i32 : i32 to index
    %c0_14 = arith.constant 0 : index
    %c0_15 = arith.constant 0 : index
    %14 = vector.load %arg12[%13, %c0_14, %c0_15] : memref<8x8x384xf32, #tpu.memory_space<vmem>>, vector<1x8x384xf32>
    %15 = vector.shape_cast %14 : vector<1x8x384xf32> to vector<8x384xf32>
    %16 = arith.index_cast %c0_i32 : i32 to index
    %c0_16 = arith.constant 0 : index
    %c0_17 = arith.constant 0 : index
    %17 = vector.load %arg2[%16, %c0_16, %c0_17] : memref<8x8x1xf32, #tpu.memory_space<vmem>>, vector<1x8x1xf32>
    %18 = vector.shape_cast %17 : vector<1x8x1xf32> to vector<8x1xf32>
    %cst_18 = arith.constant dense<0.000000e+00> : vector<8x384xf32>
    %19 = tpu.matmul %12, %8, %cst_18 {dimension_numbers = #tpu.dot_dimension_numbers<[1], [0], [0], [1], [0, 0, 1, 1], [], []>} : vector<8x128xf32>, vector<128x384xf32>, vector<8x384xf32> -> vector<8x384xf32>
    %20 = vector.extract_strided_slice %15 {offsets = [0, 0], sizes = [8, 128], strides = [1, 1]} : vector<8x384xf32> to vector<8x128xf32>
    %21 = vector.extract_strided_slice %19 {offsets = [0, 0], sizes = [8, 128], strides = [1, 1]} : vector<8x384xf32> to vector<8x128xf32>
    %22 = arith.addf %20, %21 : vector<8x128xf32>
    %23 = arith.negf %22 : vector<8x128xf32>
    %24 = math.exp %23 : vector<8x128xf32>
    %cst_19 = arith.constant 1.000000e+00 : f32
    %25 = vector.broadcast %cst_19 : f32 to vector<8x128xf32>
    %26 = arith.addf %25, %24 : vector<8x128xf32>
    %27 = arith.divf %25, %26 : vector<8x128xf32>
    %28 = vector.extract_strided_slice %15 {offsets = [0, 128], sizes = [8, 128], strides = [1, 1]} : vector<8x384xf32> to vector<8x128xf32>
    %29 = vector.extract_strided_slice %19 {offsets = [0, 128], sizes = [8, 128], strides = [1, 1]} : vector<8x384xf32> to vector<8x128xf32>
    %30 = arith.addf %28, %29 : vector<8x128xf32>
    %31 = arith.negf %30 : vector<8x128xf32>
    %32 = math.exp %31 : vector<8x128xf32>
    %cst_20 = arith.constant 1.000000e+00 : f32
    %33 = vector.broadcast %cst_20 : f32 to vector<8x128xf32>
    %34 = arith.addf %33, %32 : vector<8x128xf32>
    %35 = arith.divf %33, %34 : vector<8x128xf32>
    %36 = vector.extract_strided_slice %15 {offsets = [0, 256], sizes = [8, 128], strides = [1, 1]} : vector<8x384xf32> to vector<8x128xf32>
    %37 = vector.extract_strided_slice %19 {offsets = [0, 256], sizes = [8, 128], strides = [1, 1]} : vector<8x384xf32> to vector<8x128xf32>
    %38 = arith.addf %37, %11 : vector<8x128xf32>
    %39 = arith.mulf %27, %38 : vector<8x128xf32>
    %40 = arith.addf %36, %39 : vector<8x128xf32>
    %41 = math.tanh %40 : vector<8x128xf32>
    %42 = arith.subf %12, %41 : vector<8x128xf32>
    %43 = arith.mulf %35, %42 : vector<8x128xf32>
    %44 = arith.addf %41, %43 : vector<8x128xf32>
    %45 = vector.broadcast %18 : vector<8x1xf32> to vector<8x128xf32>
    %46 = arith.mulf %45, %44 : vector<8x128xf32>
    %47 = arith.index_cast %c0_i32 : i32 to index
    %c0_21 = arith.constant 0 : index
    %c0_22 = arith.constant 0 : index
    %48 = vector.load %arg13[%47, %c0_21, %c0_22] : memref<8x8x128xf32, #tpu.memory_space<vmem>>, vector<1x8x128xf32>
    %49 = vector.shape_cast %48 : vector<1x8x128xf32> to vector<8x128xf32>
    %50 = vector.shape_cast %46 : vector<8x128xf32> to vector<1x8x128xf32>
    tpu.vector_store %arg13[%47, %c0_21, %c0_22], %50 {strides = array<i32>} : memref<8x8x128xf32, #tpu.memory_space<vmem>>, vector<1x8x128xf32>,
    %51 = arith.subf %44, %12 : vector<8x128xf32>
    %52 = vector.broadcast %18 : vector<8x1xf32> to vector<8x128xf32>
    %53 = arith.mulf %52, %51 : vector<8x128xf32>
    %54 = arith.addf %12, %53 : vector<8x128xf32>
    %c1_i32 = arith.constant 1 : i32
    %55 = arith.index_cast %c1_i32 : i32 to index
    %c0_23 = arith.constant 0 : index
    %c0_24 = arith.constant 0 : index
    %56 = vector.load %arg12[%55, %c0_23, %c0_24] : memref<8x8x384xf32, #tpu.memory_space<vmem>>, vector<1x8x384xf32>
    %57 = vector.shape_cast %56 : vector<1x8x384xf32> to vector<8x384xf32>
    %58 = arith.index_cast %c1_i32 : i32 to index
    %c0_25 = arith.constant 0 : index
    %c0_26 = arith.constant 0 : index
    %59 = vector.load %arg2[%58, %c0_25, %c0_26] : memref<8x8x1xf32, #tpu.memory_space<vmem>>, vector<1x8x1xf32>
    %60 = vector.shape_cast %59 : vector<1x8x1xf32> to vector<8x1xf32>
    %cst_27 = arith.constant dense<0.000000e+00> : vector<8x384xf32>
    %61 = tpu.matmul %54, %8, %cst_27 {dimension_numbers = #tpu.dot_dimension_numbers<[1], [0], [0], [1], [0, 0, 1, 1], [], []>} : vector<8x128xf32>, vector<128x384xf32>, vector<8x384xf32> -> vector<8x384xf32>
    %62 = vector.extract_strided_slice %57 {offsets = [0, 0], sizes = [8, 128], strides = [1, 1]} : vector<8x384xf32> to vector<8x128xf32>
    %63 = vector.extract_strided_slice %61 {offsets = [0, 0], sizes = [8, 128], strides = [1, 1]} : vector<8x384xf32> to vector<8x128xf32>
    %64 = arith.addf %62, %63 : vector<8x128xf32>
    %65 = arith.negf %64 : vector<8x128xf32>
    %66 = math.exp %65 : vector<8x128xf32>
    %cst_28 = arith.constant 1.000000e+00 : f32
    %67 = vector.broadcast %cst_28 : f32 to vector<8x128xf32>
    %68 = arith.addf %67, %66 : vector<8x128xf32>
    %69 = arith.divf %67, %68 : vector<8x128xf32>
    %70 = vector.extract_strided_slice %57 {offsets = [0, 128], sizes = [8, 128], strides = [1, 1]} : vector<8x384xf32> to vector<8x128xf32>
    %71 = vector.extract_strided_slice %61 {offsets = [0, 128], sizes = [8, 128], strides = [1, 1]} : vector<8x384xf32> to vector<8x128xf32>
    %72 = arith.addf %70, %71 : vector<8x128xf32>
    %73 = arith.negf %72 : vector<8x128xf32>
    %74 = math.exp %73 : vector<8x128xf32>
    %cst_29 = arith.constant 1.000000e+00 : f32
    %75 = vector.broadcast %cst_29 : f32 to vector<8x128xf32>
    %76 = arith.addf %75, %74 : vector<8x128xf32>
    %77 = arith.divf %75, %76 : vector<8x128xf32>
    %78 = vector.extract_strided_slice %57 {offsets = [0, 256], sizes = [8, 128], strides = [1, 1]} : vector<8x384xf32> to vector<8x128xf32>
    %79 = vector.extract_strided_slice %61 {offsets = [0, 256], sizes = [8, 128], strides = [1, 1]} : vector<8x384xf32> to vector<8x128xf32>
    %80 = arith.addf %79, %11 : vector<8x128xf32>
    %81 = arith.mulf %69, %80 : vector<8x128xf32>
    %82 = arith.addf %78, %81 : vector<8x128xf32>
    %83 = math.tanh %82 : vector<8x128xf32>
    %84 = arith.subf %54, %83 : vector<8x128xf32>
    %85 = arith.mulf %77, %84 : vector<8x128xf32>
    %86 = arith.addf %83, %85 : vector<8x128xf32>
    %87 = vector.broadcast %60 : vector<8x1xf32> to vector<8x128xf32>
    %88 = arith.mulf %87, %86 : vector<8x128xf32>
    %89 = arith.index_cast %c1_i32 : i32 to index
    %c0_30 = arith.constant 0 : index
    %c0_31 = arith.constant 0 : index
    %90 = vector.load %arg13[%89, %c0_30, %c0_31] : memref<8x8x128xf32, #tpu.memory_space<vmem>>, vector<1x8x128xf32>
    %91 = vector.shape_cast %90 : vector<1x8x128xf32> to vector<8x128xf32>
    %92 = vector.shape_cast %88 : vector<8x128xf32> to vector<1x8x128xf32>
    tpu.vector_store %arg13[%89, %c0_30, %c0_31], %92 {strides = array<i32>} : memref<8x8x128xf32, #tpu.memory_space<vmem>>, vector<1x8x128xf32>,
    %93 = arith.subf %86, %54 : vector<8x128xf32>
    %94 = vector.broadcast %60 : vector<8x1xf32> to vector<8x128xf32>
    %95 = arith.mulf %94, %93 : vector<8x128xf32>
    %96 = arith.addf %54, %95 : vector<8x128xf32>
    %c2_i32 = arith.constant 2 : i32
    %97 = arith.index_cast %c2_i32 : i32 to index
    %c0_32 = arith.constant 0 : index
    %c0_33 = arith.constant 0 : index
    %98 = vector.load %arg12[%97, %c0_32, %c0_33] : memref<8x8x384xf32, #tpu.memory_space<vmem>>, vector<1x8x384xf32>
    %99 = vector.shape_cast %98 : vector<1x8x384xf32> to vector<8x384xf32>
    %100 = arith.index_cast %c2_i32 : i32 to index
    %c0_34 = arith.constant 0 : index
    %c0_35 = arith.constant 0 : index
    %101 = vector.load %arg2[%100, %c0_34, %c0_35] : memref<8x8x1xf32, #tpu.memory_space<vmem>>, vector<1x8x1xf32>
    %102 = vector.shape_cast %101 : vector<1x8x1xf32> to vector<8x1xf32>
    %cst_36 = arith.constant dense<0.000000e+00> : vector<8x384xf32>
    %103 = tpu.matmul %96, %8, %cst_36 {dimension_numbers = #tpu.dot_dimension_numbers<[1], [0], [0], [1], [0, 0, 1, 1], [], []>} : vector<8x128xf32>, vector<128x384xf32>, vector<8x384xf32> -> vector<8x384xf32>
    %104 = vector.extract_strided_slice %99 {offsets = [0, 0], sizes = [8, 128], strides = [1, 1]} : vector<8x384xf32> to vector<8x128xf32>
    %105 = vector.extract_strided_slice %103 {offsets = [0, 0], sizes = [8, 128], strides = [1, 1]} : vector<8x384xf32> to vector<8x128xf32>
    %106 = arith.addf %104, %105 : vector<8x128xf32>
    %107 = arith.negf %106 : vector<8x128xf32>
    %108 = math.exp %107 : vector<8x128xf32>
    %cst_37 = arith.constant 1.000000e+00 : f32
    %109 = vector.broadcast %cst_37 : f32 to vector<8x128xf32>
    %110 = arith.addf %109, %108 : vector<8x128xf32>
    %111 = arith.divf %109, %110 : vector<8x128xf32>
    %112 = vector.extract_strided_slice %99 {offsets = [0, 128], sizes = [8, 128], strides = [1, 1]} : vector<8x384xf32> to vector<8x128xf32>
    %113 = vector.extract_strided_slice %103 {offsets = [0, 128], sizes = [8, 128], strides = [1, 1]} : vector<8x384xf32> to vector<8x128xf32>
    %114 = arith.addf %112, %113 : vector<8x128xf32>
    %115 = arith.negf %114 : vector<8x128xf32>
    %116 = math.exp %115 : vector<8x128xf32>
    %cst_38 = arith.constant 1.000000e+00 : f32
    %117 = vector.broadcast %cst_38 : f32 to vector<8x128xf32>
    %118 = arith.addf %117, %116 : vector<8x128xf32>
    %119 = arith.divf %117, %118 : vector<8x128xf32>
    %120 = vector.extract_strided_slice %99 {offsets = [0, 256], sizes = [8, 128], strides = [1, 1]} : vector<8x384xf32> to vector<8x128xf32>
    %121 = vector.extract_strided_slice %103 {offsets = [0, 256], sizes = [8, 128], strides = [1, 1]} : vector<8x384xf32> to vector<8x128xf32>
    %122 = arith.addf %121, %11 : vector<8x128xf32>
    %123 = arith.mulf %111, %122 : vector<8x128xf32>
    %124 = arith.addf %120, %123 : vector<8x128xf32>
    %125 = math.tanh %124 : vector<8x128xf32>
    %126 = arith.subf %96, %125 : vector<8x128xf32>
    %127 = arith.mulf %119, %126 : vector<8x128xf32>
    %128 = arith.addf %125, %127 : vector<8x128xf32>
    %129 = vector.broadcast %102 : vector<8x1xf32> to vector<8x128xf32>
    %130 = arith.mulf %129, %128 : vector<8x128xf32>
    %131 = arith.index_cast %c2_i32 : i32 to index
    %c0_39 = arith.constant 0 : index
    %c0_40 = arith.constant 0 : index
    %132 = vector.load %arg13[%131, %c0_39, %c0_40] : memref<8x8x128xf32, #tpu.memory_space<vmem>>, vector<1x8x128xf32>
    %133 = vector.shape_cast %132 : vector<1x8x128xf32> to vector<8x128xf32>
    %134 = vector.shape_cast %130 : vector<8x128xf32> to vector<1x8x128xf32>
    tpu.vector_store %arg13[%131, %c0_39, %c0_40], %134 {strides = array<i32>} : memref<8x8x128xf32, #tpu.memory_space<vmem>>, vector<1x8x128xf32>,
    %135 = arith.subf %128, %96 : vector<8x128xf32>
    %136 = vector.broadcast %102 : vector<8x1xf32> to vector<8x128xf32>
    %137 = arith.mulf %136, %135 : vector<8x128xf32>
    %138 = arith.addf %96, %137 : vector<8x128xf32>
    %c3_i32 = arith.constant 3 : i32
    %139 = arith.index_cast %c3_i32 : i32 to index
    %c0_41 = arith.constant 0 : index
    %c0_42 = arith.constant 0 : index
    %140 = vector.load %arg12[%139, %c0_41, %c0_42] : memref<8x8x384xf32, #tpu.memory_space<vmem>>, vector<1x8x384xf32>
    %141 = vector.shape_cast %140 : vector<1x8x384xf32> to vector<8x384xf32>
    %142 = arith.index_cast %c3_i32 : i32 to index
    %c0_43 = arith.constant 0 : index
    %c0_44 = arith.constant 0 : index
    %143 = vector.load %arg2[%142, %c0_43, %c0_44] : memref<8x8x1xf32, #tpu.memory_space<vmem>>, vector<1x8x1xf32>
    %144 = vector.shape_cast %143 : vector<1x8x1xf32> to vector<8x1xf32>
    %cst_45 = arith.constant dense<0.000000e+00> : vector<8x384xf32>
    %145 = tpu.matmul %138, %8, %cst_45 {dimension_numbers = #tpu.dot_dimension_numbers<[1], [0], [0], [1], [0, 0, 1, 1], [], []>} : vector<8x128xf32>, vector<128x384xf32>, vector<8x384xf32> -> vector<8x384xf32>
    %146 = vector.extract_strided_slice %141 {offsets = [0, 0], sizes = [8, 128], strides = [1, 1]} : vector<8x384xf32> to vector<8x128xf32>
    %147 = vector.extract_strided_slice %145 {offsets = [0, 0], sizes = [8, 128], strides = [1, 1]} : vector<8x384xf32> to vector<8x128xf32>
    %148 = arith.addf %146, %147 : vector<8x128xf32>
    %149 = arith.negf %148 : vector<8x128xf32>
    %150 = math.exp %149 : vector<8x128xf32>
    %cst_46 = arith.constant 1.000000e+00 : f32
    %151 = vector.broadcast %cst_46 : f32 to vector<8x128xf32>
    %152 = arith.addf %151, %150 : vector<8x128xf32>
    %153 = arith.divf %151, %152 : vector<8x128xf32>
    %154 = vector.extract_strided_slice %141 {offsets = [0, 128], sizes = [8, 128], strides = [1, 1]} : vector<8x384xf32> to vector<8x128xf32>
    %155 = vector.extract_strided_slice %145 {offsets = [0, 128], sizes = [8, 128], strides = [1, 1]} : vector<8x384xf32> to vector<8x128xf32>
    %156 = arith.addf %154, %155 : vector<8x128xf32>
    %157 = arith.negf %156 : vector<8x128xf32>
    %158 = math.exp %157 : vector<8x128xf32>
    %cst_47 = arith.constant 1.000000e+00 : f32
    %159 = vector.broadcast %cst_47 : f32 to vector<8x128xf32>
    %160 = arith.addf %159, %158 : vector<8x128xf32>
    %161 = arith.divf %159, %160 : vector<8x128xf32>
    %162 = vector.extract_strided_slice %141 {offsets = [0, 256], sizes = [8, 128], strides = [1, 1]} : vector<8x384xf32> to vector<8x128xf32>
    %163 = vector.extract_strided_slice %145 {offsets = [0, 256], sizes = [8, 128], strides = [1, 1]} : vector<8x384xf32> to vector<8x128xf32>
    %164 = arith.addf %163, %11 : vector<8x128xf32>
    %165 = arith.mulf %153, %164 : vector<8x128xf32>
    %166 = arith.addf %162, %165 : vector<8x128xf32>
    %167 = math.tanh %166 : vector<8x128xf32>
    %168 = arith.subf %138, %167 : vector<8x128xf32>
    %169 = arith.mulf %161, %168 : vector<8x128xf32>
    %170 = arith.addf %167, %169 : vector<8x128xf32>
    %171 = vector.broadcast %144 : vector<8x1xf32> to vector<8x128xf32>
    %172 = arith.mulf %171, %170 : vector<8x128xf32>
    %173 = arith.index_cast %c3_i32 : i32 to index
    %c0_48 = arith.constant 0 : index
    %c0_49 = arith.constant 0 : index
    %174 = vector.load %arg13[%173, %c0_48, %c0_49] : memref<8x8x128xf32, #tpu.memory_space<vmem>>, vector<1x8x128xf32>
    %175 = vector.shape_cast %174 : vector<1x8x128xf32> to vector<8x128xf32>
    %176 = vector.shape_cast %172 : vector<8x128xf32> to vector<1x8x128xf32>
    tpu.vector_store %arg13[%173, %c0_48, %c0_49], %176 {strides = array<i32>} : memref<8x8x128xf32, #tpu.memory_space<vmem>>, vector<1x8x128xf32>,
    %177 = arith.subf %170, %138 : vector<8x128xf32>
    %178 = vector.broadcast %144 : vector<8x1xf32> to vector<8x128xf32>
    %179 = arith.mulf %178, %177 : vector<8x128xf32>
    %180 = arith.addf %138, %179 : vector<8x128xf32>
    %c4_i32 = arith.constant 4 : i32
    %181 = arith.index_cast %c4_i32 : i32 to index
    %c0_50 = arith.constant 0 : index
    %c0_51 = arith.constant 0 : index
    %182 = vector.load %arg12[%181, %c0_50, %c0_51] : memref<8x8x384xf32, #tpu.memory_space<vmem>>, vector<1x8x384xf32>
    %183 = vector.shape_cast %182 : vector<1x8x384xf32> to vector<8x384xf32>
    %184 = arith.index_cast %c4_i32 : i32 to index
    %c0_52 = arith.constant 0 : index
    %c0_53 = arith.constant 0 : index
    %185 = vector.load %arg2[%184, %c0_52, %c0_53] : memref<8x8x1xf32, #tpu.memory_space<vmem>>, vector<1x8x1xf32>
    %186 = vector.shape_cast %185 : vector<1x8x1xf32> to vector<8x1xf32>
    %cst_54 = arith.constant dense<0.000000e+00> : vector<8x384xf32>
    %187 = tpu.matmul %180, %8, %cst_54 {dimension_numbers = #tpu.dot_dimension_numbers<[1], [0], [0], [1], [0, 0, 1, 1], [], []>} : vector<8x128xf32>, vector<128x384xf32>, vector<8x384xf32> -> vector<8x384xf32>
    %188 = vector.extract_strided_slice %183 {offsets = [0, 0], sizes = [8, 128], strides = [1, 1]} : vector<8x384xf32> to vector<8x128xf32>
    %189 = vector.extract_strided_slice %187 {offsets = [0, 0], sizes = [8, 128], strides = [1, 1]} : vector<8x384xf32> to vector<8x128xf32>
    %190 = arith.addf %188, %189 : vector<8x128xf32>
    %191 = arith.negf %190 : vector<8x128xf32>
    %192 = math.exp %191 : vector<8x128xf32>
    %cst_55 = arith.constant 1.000000e+00 : f32
    %193 = vector.broadcast %cst_55 : f32 to vector<8x128xf32>
    %194 = arith.addf %193, %192 : vector<8x128xf32>
    %195 = arith.divf %193, %194 : vector<8x128xf32>
    %196 = vector.extract_strided_slice %183 {offsets = [0, 128], sizes = [8, 128], strides = [1, 1]} : vector<8x384xf32> to vector<8x128xf32>
    %197 = vector.extract_strided_slice %187 {offsets = [0, 128], sizes = [8, 128], strides = [1, 1]} : vector<8x384xf32> to vector<8x128xf32>
    %198 = arith.addf %196, %197 : vector<8x128xf32>
    %199 = arith.negf %198 : vector<8x128xf32>
    %200 = math.exp %199 : vector<8x128xf32>
    %cst_56 = arith.constant 1.000000e+00 : f32
    %201 = vector.broadcast %cst_56 : f32 to vector<8x128xf32>
    %202 = arith.addf %201, %200 : vector<8x128xf32>
    %203 = arith.divf %201, %202 : vector<8x128xf32>
    %204 = vector.extract_strided_slice %183 {offsets = [0, 256], sizes = [8, 128], strides = [1, 1]} : vector<8x384xf32> to vector<8x128xf32>
    %205 = vector.extract_strided_slice %187 {offsets = [0, 256], sizes = [8, 128], strides = [1, 1]} : vector<8x384xf32> to vector<8x128xf32>
    %206 = arith.addf %205, %11 : vector<8x128xf32>
    %207 = arith.mulf %195, %206 : vector<8x128xf32>
    %208 = arith.addf %204, %207 : vector<8x128xf32>
    %209 = math.tanh %208 : vector<8x128xf32>
    %210 = arith.subf %180, %209 : vector<8x128xf32>
    %211 = arith.mulf %203, %210 : vector<8x128xf32>
    %212 = arith.addf %209, %211 : vector<8x128xf32>
    %213 = vector.broadcast %186 : vector<8x1xf32> to vector<8x128xf32>
    %214 = arith.mulf %213, %212 : vector<8x128xf32>
    %215 = arith.index_cast %c4_i32 : i32 to index
    %c0_57 = arith.constant 0 : index
    %c0_58 = arith.constant 0 : index
    %216 = vector.load %arg13[%215, %c0_57, %c0_58] : memref<8x8x128xf32, #tpu.memory_space<vmem>>, vector<1x8x128xf32>
    %217 = vector.shape_cast %216 : vector<1x8x128xf32> to vector<8x128xf32>
    %218 = vector.shape_cast %214 : vector<8x128xf32> to vector<1x8x128xf32>
    tpu.vector_store %arg13[%215, %c0_57, %c0_58], %218 {strides = array<i32>} : memref<8x8x128xf32, #tpu.memory_space<vmem>>, vector<1x8x128xf32>,
    %219 = arith.subf %212, %180 : vector<8x128xf32>
    %220 = vector.broadcast %186 : vector<8x1xf32> to vector<8x128xf32>
    %221 = arith.mulf %220, %219 : vector<8x128xf32>
    %222 = arith.addf %180, %221 : vector<8x128xf32>
    %c5_i32 = arith.constant 5 : i32
    %223 = arith.index_cast %c5_i32 : i32 to index
    %c0_59 = arith.constant 0 : index
    %c0_60 = arith.constant 0 : index
    %224 = vector.load %arg12[%223, %c0_59, %c0_60] : memref<8x8x384xf32, #tpu.memory_space<vmem>>, vector<1x8x384xf32>
    %225 = vector.shape_cast %224 : vector<1x8x384xf32> to vector<8x384xf32>
    %226 = arith.index_cast %c5_i32 : i32 to index
    %c0_61 = arith.constant 0 : index
    %c0_62 = arith.constant 0 : index
    %227 = vector.load %arg2[%226, %c0_61, %c0_62] : memref<8x8x1xf32, #tpu.memory_space<vmem>>, vector<1x8x1xf32>
    %228 = vector.shape_cast %227 : vector<1x8x1xf32> to vector<8x1xf32>
    %cst_63 = arith.constant dense<0.000000e+00> : vector<8x384xf32>
    %229 = tpu.matmul %222, %8, %cst_63 {dimension_numbers = #tpu.dot_dimension_numbers<[1], [0], [0], [1], [0, 0, 1, 1], [], []>} : vector<8x128xf32>, vector<128x384xf32>, vector<8x384xf32> -> vector<8x384xf32>
    %230 = vector.extract_strided_slice %225 {offsets = [0, 0], sizes = [8, 128], strides = [1, 1]} : vector<8x384xf32> to vector<8x128xf32>
    %231 = vector.extract_strided_slice %229 {offsets = [0, 0], sizes = [8, 128], strides = [1, 1]} : vector<8x384xf32> to vector<8x128xf32>
    %232 = arith.addf %230, %231 : vector<8x128xf32>
    %233 = arith.negf %232 : vector<8x128xf32>
    %234 = math.exp %233 : vector<8x128xf32>
    %cst_64 = arith.constant 1.000000e+00 : f32
    %235 = vector.broadcast %cst_64 : f32 to vector<8x128xf32>
    %236 = arith.addf %235, %234 : vector<8x128xf32>
    %237 = arith.divf %235, %236 : vector<8x128xf32>
    %238 = vector.extract_strided_slice %225 {offsets = [0, 128], sizes = [8, 128], strides = [1, 1]} : vector<8x384xf32> to vector<8x128xf32>
    %239 = vector.extract_strided_slice %229 {offsets = [0, 128], sizes = [8, 128], strides = [1, 1]} : vector<8x384xf32> to vector<8x128xf32>
    %240 = arith.addf %238, %239 : vector<8x128xf32>
    %241 = arith.negf %240 : vector<8x128xf32>
    %242 = math.exp %241 : vector<8x128xf32>
    %cst_65 = arith.constant 1.000000e+00 : f32
    %243 = vector.broadcast %cst_65 : f32 to vector<8x128xf32>
    %244 = arith.addf %243, %242 : vector<8x128xf32>
    %245 = arith.divf %243, %244 : vector<8x128xf32>
    %246 = vector.extract_strided_slice %225 {offsets = [0, 256], sizes = [8, 128], strides = [1, 1]} : vector<8x384xf32> to vector<8x128xf32>
    %247 = vector.extract_strided_slice %229 {offsets = [0, 256], sizes = [8, 128], strides = [1, 1]} : vector<8x384xf32> to vector<8x128xf32>
    %248 = arith.addf %247, %11 : vector<8x128xf32>
    %249 = arith.mulf %237, %248 : vector<8x128xf32>
    %250 = arith.addf %246, %249 : vector<8x128xf32>
    %251 = math.tanh %250 : vector<8x128xf32>
    %252 = arith.subf %222, %251 : vector<8x128xf32>
    %253 = arith.mulf %245, %252 : vector<8x128xf32>
    %254 = arith.addf %251, %253 : vector<8x128xf32>
    %255 = vector.broadcast %228 : vector<8x1xf32> to vector<8x128xf32>
    %256 = arith.mulf %255, %254 : vector<8x128xf32>
    %257 = arith.index_cast %c5_i32 : i32 to index
    %c0_66 = arith.constant 0 : index
    %c0_67 = arith.constant 0 : index
    %258 = vector.load %arg13[%257, %c0_66, %c0_67] : memref<8x8x128xf32, #tpu.memory_space<vmem>>, vector<1x8x128xf32>
    %259 = vector.shape_cast %258 : vector<1x8x128xf32> to vector<8x128xf32>
    %260 = vector.shape_cast %256 : vector<8x128xf32> to vector<1x8x128xf32>
    tpu.vector_store %arg13[%257, %c0_66, %c0_67], %260 {strides = array<i32>} : memref<8x8x128xf32, #tpu.memory_space<vmem>>, vector<1x8x128xf32>,
    %261 = arith.subf %254, %222 : vector<8x128xf32>
    %262 = vector.broadcast %228 : vector<8x1xf32> to vector<8x128xf32>
    %263 = arith.mulf %262, %261 : vector<8x128xf32>
    %264 = arith.addf %222, %263 : vector<8x128xf32>
    %c6_i32 = arith.constant 6 : i32
    %265 = arith.index_cast %c6_i32 : i32 to index
    %c0_68 = arith.constant 0 : index
    %c0_69 = arith.constant 0 : index
    %266 = vector.load %arg12[%265, %c0_68, %c0_69] : memref<8x8x384xf32, #tpu.memory_space<vmem>>, vector<1x8x384xf32>
    %267 = vector.shape_cast %266 : vector<1x8x384xf32> to vector<8x384xf32>
    %268 = arith.index_cast %c6_i32 : i32 to index
    %c0_70 = arith.constant 0 : index
    %c0_71 = arith.constant 0 : index
    %269 = vector.load %arg2[%268, %c0_70, %c0_71] : memref<8x8x1xf32, #tpu.memory_space<vmem>>, vector<1x8x1xf32>
    %270 = vector.shape_cast %269 : vector<1x8x1xf32> to vector<8x1xf32>
    %cst_72 = arith.constant dense<0.000000e+00> : vector<8x384xf32>
    %271 = tpu.matmul %264, %8, %cst_72 {dimension_numbers = #tpu.dot_dimension_numbers<[1], [0], [0], [1], [0, 0, 1, 1], [], []>} : vector<8x128xf32>, vector<128x384xf32>, vector<8x384xf32> -> vector<8x384xf32>
    %272 = vector.extract_strided_slice %267 {offsets = [0, 0], sizes = [8, 128], strides = [1, 1]} : vector<8x384xf32> to vector<8x128xf32>
    %273 = vector.extract_strided_slice %271 {offsets = [0, 0], sizes = [8, 128], strides = [1, 1]} : vector<8x384xf32> to vector<8x128xf32>
    %274 = arith.addf %272, %273 : vector<8x128xf32>
    %275 = arith.negf %274 : vector<8x128xf32>
    %276 = math.exp %275 : vector<8x128xf32>
    %cst_73 = arith.constant 1.000000e+00 : f32
    %277 = vector.broadcast %cst_73 : f32 to vector<8x128xf32>
    %278 = arith.addf %277, %276 : vector<8x128xf32>
    %279 = arith.divf %277, %278 : vector<8x128xf32>
    %280 = vector.extract_strided_slice %267 {offsets = [0, 128], sizes = [8, 128], strides = [1, 1]} : vector<8x384xf32> to vector<8x128xf32>
    %281 = vector.extract_strided_slice %271 {offsets = [0, 128], sizes = [8, 128], strides = [1, 1]} : vector<8x384xf32> to vector<8x128xf32>
    %282 = arith.addf %280, %281 : vector<8x128xf32>
    %283 = arith.negf %282 : vector<8x128xf32>
    %284 = math.exp %283 : vector<8x128xf32>
    %cst_74 = arith.constant 1.000000e+00 : f32
    %285 = vector.broadcast %cst_74 : f32 to vector<8x128xf32>
    %286 = arith.addf %285, %284 : vector<8x128xf32>
    %287 = arith.divf %285, %286 : vector<8x128xf32>
    %288 = vector.extract_strided_slice %267 {offsets = [0, 256], sizes = [8, 128], strides = [1, 1]} : vector<8x384xf32> to vector<8x128xf32>
    %289 = vector.extract_strided_slice %271 {offsets = [0, 256], sizes = [8, 128], strides = [1, 1]} : vector<8x384xf32> to vector<8x128xf32>
    %290 = arith.addf %289, %11 : vector<8x128xf32>
    %291 = arith.mulf %279, %290 : vector<8x128xf32>
    %292 = arith.addf %288, %291 : vector<8x128xf32>
    %293 = math.tanh %292 : vector<8x128xf32>
    %294 = arith.subf %264, %293 : vector<8x128xf32>
    %295 = arith.mulf %287, %294 : vector<8x128xf32>
    %296 = arith.addf %293, %295 : vector<8x128xf32>
    %297 = vector.broadcast %270 : vector<8x1xf32> to vector<8x128xf32>
    %298 = arith.mulf %297, %296 : vector<8x128xf32>
    %299 = arith.index_cast %c6_i32 : i32 to index
    %c0_75 = arith.constant 0 : index
    %c0_76 = arith.constant 0 : index
    %300 = vector.load %arg13[%299, %c0_75, %c0_76] : memref<8x8x128xf32, #tpu.memory_space<vmem>>, vector<1x8x128xf32>
    %301 = vector.shape_cast %300 : vector<1x8x128xf32> to vector<8x128xf32>
    %302 = vector.shape_cast %298 : vector<8x128xf32> to vector<1x8x128xf32>
    tpu.vector_store %arg13[%299, %c0_75, %c0_76], %302 {strides = array<i32>} : memref<8x8x128xf32, #tpu.memory_space<vmem>>, vector<1x8x128xf32>,
    %303 = arith.subf %296, %264 : vector<8x128xf32>
    %304 = vector.broadcast %270 : vector<8x1xf32> to vector<8x128xf32>
    %305 = arith.mulf %304, %303 : vector<8x128xf32>
    %306 = arith.addf %264, %305 : vector<8x128xf32>
    %c7_i32 = arith.constant 7 : i32
    %307 = arith.index_cast %c7_i32 : i32 to index
    %c0_77 = arith.constant 0 : index
    %c0_78 = arith.constant 0 : index
    %308 = vector.load %arg12[%307, %c0_77, %c0_78] : memref<8x8x384xf32, #tpu.memory_space<vmem>>, vector<1x8x384xf32>
    %309 = vector.shape_cast %308 : vector<1x8x384xf32> to vector<8x384xf32>
    %310 = arith.index_cast %c7_i32 : i32 to index
    %c0_79 = arith.constant 0 : index
    %c0_80 = arith.constant 0 : index
    %311 = vector.load %arg2[%310, %c0_79, %c0_80] : memref<8x8x1xf32, #tpu.memory_space<vmem>>, vector<1x8x1xf32>
    %312 = vector.shape_cast %311 : vector<1x8x1xf32> to vector<8x1xf32>
    %cst_81 = arith.constant dense<0.000000e+00> : vector<8x384xf32>
    %313 = tpu.matmul %306, %8, %cst_81 {dimension_numbers = #tpu.dot_dimension_numbers<[1], [0], [0], [1], [0, 0, 1, 1], [], []>} : vector<8x128xf32>, vector<128x384xf32>, vector<8x384xf32> -> vector<8x384xf32>
    %314 = vector.extract_strided_slice %309 {offsets = [0, 0], sizes = [8, 128], strides = [1, 1]} : vector<8x384xf32> to vector<8x128xf32>
    %315 = vector.extract_strided_slice %313 {offsets = [0, 0], sizes = [8, 128], strides = [1, 1]} : vector<8x384xf32> to vector<8x128xf32>
    %316 = arith.addf %314, %315 : vector<8x128xf32>
    %317 = arith.negf %316 : vector<8x128xf32>
    %318 = math.exp %317 : vector<8x128xf32>
    %cst_82 = arith.constant 1.000000e+00 : f32
    %319 = vector.broadcast %cst_82 : f32 to vector<8x128xf32>
    %320 = arith.addf %319, %318 : vector<8x128xf32>
    %321 = arith.divf %319, %320 : vector<8x128xf32>
    %322 = vector.extract_strided_slice %309 {offsets = [0, 128], sizes = [8, 128], strides = [1, 1]} : vector<8x384xf32> to vector<8x128xf32>
    %323 = vector.extract_strided_slice %313 {offsets = [0, 128], sizes = [8, 128], strides = [1, 1]} : vector<8x384xf32> to vector<8x128xf32>
    %324 = arith.addf %322, %323 : vector<8x128xf32>
    %325 = arith.negf %324 : vector<8x128xf32>
    %326 = math.exp %325 : vector<8x128xf32>
    %cst_83 = arith.constant 1.000000e+00 : f32
    %327 = vector.broadcast %cst_83 : f32 to vector<8x128xf32>
    %328 = arith.addf %327, %326 : vector<8x128xf32>
    %329 = arith.divf %327, %328 : vector<8x128xf32>
    %330 = vector.extract_strided_slice %309 {offsets = [0, 256], sizes = [8, 128], strides = [1, 1]} : vector<8x384xf32> to vector<8x128xf32>
    %331 = vector.extract_strided_slice %313 {offsets = [0, 256], sizes = [8, 128], strides = [1, 1]} : vector<8x384xf32> to vector<8x128xf32>
    %332 = arith.addf %331, %11 : vector<8x128xf32>
    %333 = arith.mulf %321, %332 : vector<8x128xf32>
    %334 = arith.addf %330, %333 : vector<8x128xf32>
    %335 = math.tanh %334 : vector<8x128xf32>
    %336 = arith.subf %306, %335 : vector<8x128xf32>
    %337 = arith.mulf %329, %336 : vector<8x128xf32>
    %338 = arith.addf %335, %337 : vector<8x128xf32>
    %339 = vector.broadcast %312 : vector<8x1xf32> to vector<8x128xf32>
    %340 = arith.mulf %339, %338 : vector<8x128xf32>
    %341 = arith.index_cast %c7_i32 : i32 to index
    %c0_84 = arith.constant 0 : index
    %c0_85 = arith.constant 0 : index
    %342 = vector.load %arg13[%341, %c0_84, %c0_85] : memref<8x8x128xf32, #tpu.memory_space<vmem>>, vector<1x8x128xf32>
    %343 = vector.shape_cast %342 : vector<1x8x128xf32> to vector<8x128xf32>
    %344 = vector.shape_cast %340 : vector<8x128xf32> to vector<1x8x128xf32>
    tpu.vector_store %arg13[%341, %c0_84, %c0_85], %344 {strides = array<i32>} : memref<8x8x128xf32, #tpu.memory_space<vmem>>, vector<1x8x128xf32>,
    %345 = arith.subf %338, %306 : vector<8x128xf32>
    %346 = vector.broadcast %312 : vector<8x1xf32> to vector<8x128xf32>
    %347 = arith.mulf %346, %345 : vector<8x128xf32>
    %348 = arith.addf %306, %347 : vector<8x128xf32>
    %c8_i32 = arith.constant 8 : i32
    %c0_86 = arith.constant 0 : index
    %c0_87 = arith.constant 0 : index
    %c0_88 = arith.constant 0 : index
    %349 = vector.load %arg13[%c0_86, %c0_87, %c0_88] : memref<8x8x128xf32, #tpu.memory_space<vmem>>, vector<8x8x128xf32>
    %c0_89 = arith.constant 0 : index
    %c0_90 = arith.constant 0 : index
    %c0_91 = arith.constant 0 : index
    %350 = vector.load %arg2[%c0_89, %c0_90, %c0_91] : memref<8x8x1xf32, #tpu.memory_space<vmem>>, vector<8x8x1xf32>
    %c0_92 = arith.constant 0 : index
    %c0_93 = arith.constant 0 : index
    %351 = vector.load %arg7[%c0_92, %c0_93] : memref<128x128xf32, #tpu.memory_space<vmem>>, vector<128x128xf32>
    %cst_94 = arith.constant dense<0.000000e+00> : vector<8x128xf32>
    %352 = tpu.matmul %348, %351, %cst_94 {dimension_numbers = #tpu.dot_dimension_numbers<[1], [0], [0], [1], [0, 0, 1, 1], [], []>} : vector<8x128xf32>, vector<128x128xf32>, vector<8x128xf32> -> vector<8x128xf32>
    %c0_95 = arith.constant 0 : index
    %c0_96 = arith.constant 0 : index
    %353 = vector.load %arg8[%c0_95, %c0_96] : memref<128x128xf32, #tpu.memory_space<vmem>>, vector<128x128xf32>
    "tpu.trace_start"() <{level = 10 : i32, message = "lbh,hk->lbk"}> : () -> ()
    %cst_97 = arith.constant dense<0.000000e+00> : vector<8x8x128xf32>
    %354 = tpu.matmul %349, %353, %cst_97 {dimension_numbers = #tpu.dot_dimension_numbers<[2], [0], [0, 1], [1], [0, 0, 0, 1, 1, 1], [], []>} : vector<8x8x128xf32>, vector<128x128xf32>, vector<8x8x128xf32> -> vector<8x8x128xf32>
    "tpu.trace_stop"() : () -> ()
    %355 = vector.shape_cast %352 : vector<8x128xf32> to vector<1x8x128xf32>
    %356 = vector.broadcast %355 : vector<1x8x128xf32> to vector<8x8x128xf32>
    %357 = arith.addf %356, %354 : vector<8x8x128xf32>
    %358 = arith.negf %357 : vector<8x8x128xf32>
    %359 = math.exp %358 : vector<8x8x128xf32>
    %cst_98 = arith.constant 1.000000e+00 : f32
    %360 = vector.broadcast %cst_98 : f32 to vector<8x8x128xf32>
    %361 = arith.addf %360, %359 : vector<8x8x128xf32>
    %362 = arith.divf %360, %361 : vector<8x8x128xf32>
    %c0_99 = arith.constant 0 : index
    %c0_100 = arith.constant 0 : index
    %363 = vector.load %arg9[%c0_99, %c0_100] : memref<1x128xf32, #tpu.memory_space<vmem>>, vector<1x128xf32>
    %364 = vector.shape_cast %363 : vector<1x128xf32> to vector<1x1x128xf32>
    %365 = vector.broadcast %364 : vector<1x1x128xf32> to vector<8x8x128xf32>
    %366 = arith.mulf %362, %365 : vector<8x8x128xf32>
    %cst_101 = arith.constant dense<0.000000e+00> : vector<8x8xf32>
    %367 = vector.multi_reduction <add>, %366, %cst_101 [2] : vector<8x8x128xf32> to vector<8x8xf32>
    %368 = vector.shape_cast %367 : vector<8x8xf32> to vector<8x8x1xf32>
    %cst_102 = arith.constant dense<0.000000e+00> : vector<8x1xf32>
    %369 = vector.multi_reduction <add>, %350, %cst_102 [0] : vector<8x8x1xf32> to vector<8x1xf32>
    %370 = vector.shape_cast %369 : vector<8x1xf32> to vector<1x8x1xf32>
    %cst_103 = arith.constant 0.000000e+00 : f32
    %371 = vector.broadcast %cst_103 : f32 to vector<1x8x1xf32>
    %372 = arith.cmpf ogt, %370, %371 : vector<1x8x1xf32>
    %cst_104 = arith.constant 0.000000e+00 : f32
    %373 = vector.broadcast %cst_104 : f32 to vector<8x8x1xf32>
    %374 = arith.cmpf ogt, %350, %373 : vector<8x8x1xf32>
    %cst_105 = arith.constant -1.000000e+30 : f32
    %375 = vector.broadcast %cst_105 : f32 to vector<8x8x1xf32>
    %376 = arith.select %374, %368, %375 : vector<8x8x1xi1>, vector<8x8x1xf32>
    %cst_106 = arith.constant dense<0xFF800000> : vector<8x1xf32>
    %377 = vector.multi_reduction <maximumf>, %376, %cst_106 [0] : vector<8x8x1xf32> to vector<8x1xf32>
    %378 = vector.shape_cast %377 : vector<8x1xf32> to vector<1x8x1xf32>
    %cst_107 = arith.constant 0.000000e+00 : f32
    %379 = vector.broadcast %cst_107 : f32 to vector<1x8x1xf32>
    %380 = arith.select %372, %378, %379 : vector<1x8x1xi1>, vector<1x8x1xf32>
    %cst_108 = arith.constant 0.000000e+00 : f32
    %381 = vector.broadcast %cst_108 : f32 to vector<8x8x1xf32>
    %382 = arith.cmpf ogt, %350, %381 : vector<8x8x1xf32>
    %383 = vector.broadcast %380 : vector<1x8x1xf32> to vector<8x8x1xf32>
    %384 = arith.subf %368, %383 : vector<8x8x1xf32>
    %cst_109 = arith.constant -1.000000e+30 : f32
    %385 = vector.broadcast %cst_109 : f32 to vector<8x8x1xf32>
    %386 = arith.select %382, %384, %385 : vector<8x8x1xi1>, vector<8x8x1xf32>
    %387 = math.exp %386 : vector<8x8x1xf32>
    %cst_110 = arith.constant dense<0.000000e+00> : vector<8x1xf32>
    %388 = vector.multi_reduction <add>, %387, %cst_110 [0] : vector<8x8x1xf32> to vector<8x1xf32>
    %389 = vector.shape_cast %388 : vector<8x1xf32> to vector<1x8x1xf32>
    %cst_111 = arith.constant 1.000000e+00 : f32
    %390 = vector.broadcast %cst_111 : f32 to vector<1x8x1xf32>
    %391 = arith.select %372, %389, %390 : vector<1x8x1xi1>, vector<1x8x1xf32>
    %392 = vector.broadcast %391 : vector<1x8x1xf32> to vector<8x8x1xf32>
    %393 = arith.divf %387, %392 : vector<8x8x1xf32>
    %394 = vector.broadcast %393 : vector<8x8x1xf32> to vector<8x8x128xf32>
    %395 = arith.mulf %394, %349 : vector<8x8x128xf32>
    %cst_112 = arith.constant dense<0.000000e+00> : vector<8x128xf32>
    %396 = vector.multi_reduction <add>, %395, %cst_112 [0] : vector<8x8x128xf32> to vector<8x128xf32>
    %397 = tpu.concatenate %348, %396 in 1 : vector<8x128xf32>, vector<8x128xf32> -> vector<8x256xf32>
    %c0_113 = arith.constant 0 : index
    %c0_114 = arith.constant 0 : index
    %398 = vector.load %arg10[%c0_113, %c0_114] : memref<256x16xf32, #tpu.memory_space<vmem>>, vector<256x16xf32>
    %cst_115 = arith.constant dense<0.000000e+00> : vector<8x16xf32>
    %399 = tpu.matmul %397, %398, %cst_115 {dimension_numbers = #tpu.dot_dimension_numbers<[1], [0], [0], [1], [0, 0, 1, 1], [], []>} : vector<8x256xf32>, vector<256x16xf32>, vector<8x16xf32> -> vector<8x16xf32>
    %c0_116 = arith.constant 0 : index
    %c0_117 = arith.constant 0 : index
    %400 = vector.load %arg11[%c0_116, %c0_117] : memref<8x16xf32, #tpu.memory_space<vmem>>, vector<8x16xf32>
    tpu.vector_store %arg11[%c0_116, %c0_117], %399 {strides = array<i32>} : memref<8x16xf32, #tpu.memory_space<vmem>>, vector<8x16xf32>,
    return
  }
  func.func @transform_0(%arg0: i32) -> (i32, i32, i32) {
    %c0_i32 = arith.constant 0 : i32
    %c0_i32_0 = arith.constant 0 : i32
    %c0_i32_1 = arith.constant 0 : i32
    return %c0_i32, %arg0, %c0_i32_0 : i32, i32, i32
  }
  func.func @transform_1(%arg0: i32) -> (i32, i32, i32) {
    %c0_i32 = arith.constant 0 : i32
    %c0_i32_0 = arith.constant 0 : i32
    %c0_i32_1 = arith.constant 0 : i32
    return %c0_i32, %arg0, %c0_i32_0 : i32, i32, i32
  }
  func.func @transform_2(%arg0: i32) -> (i32, i32) {
    %c0_i32 = arith.constant 0 : i32
    %c0_i32_0 = arith.constant 0 : i32
    %c0_i32_1 = arith.constant 0 : i32
    return %c0_i32, %c0_i32_0 : i32, i32
  }
  func.func @transform_3(%arg0: i32) -> (i32, i32) {
    %c0_i32 = arith.constant 0 : i32
    %c0_i32_0 = arith.constant 0 : i32
    %c0_i32_1 = arith.constant 0 : i32
    return %c0_i32, %c0_i32_0 : i32, i32
  }
  func.func @transform_4(%arg0: i32) -> (i32, i32) {
    %c0_i32 = arith.constant 0 : i32
    %c0_i32_0 = arith.constant 0 : i32
    %c0_i32_1 = arith.constant 0 : i32
    return %c0_i32, %c0_i32_0 : i32, i32
  }
  func.func @transform_5(%arg0: i32) -> (i32, i32) {
    %c0_i32 = arith.constant 0 : i32
    %c0_i32_0 = arith.constant 0 : i32
    %c0_i32_1 = arith.constant 0 : i32
    return %c0_i32, %c0_i32_0 : i32, i32
  }
  func.func @transform_6(%arg0: i32) -> (i32, i32) {
    %c0_i32 = arith.constant 0 : i32
    %c0_i32_0 = arith.constant 0 : i32
    %c0_i32_1 = arith.constant 0 : i32
    return %c0_i32, %c0_i32_0 : i32, i32
  }
  func.func @transform_7(%arg0: i32) -> (i32, i32) {
    %c0_i32 = arith.constant 0 : i32
    %c0_i32_0 = arith.constant 0 : i32
    %c0_i32_1 = arith.constant 0 : i32
    return %c0_i32, %c0_i32_0 : i32, i32
  }
  func.func @transform_8(%arg0: i32) -> (i32, i32) {
    %c0_i32 = arith.constant 0 : i32
    %c0_i32_0 = arith.constant 0 : i32
    %c0_i32_1 = arith.constant 0 : i32
    return %c0_i32, %c0_i32_0 : i32, i32
  }
  func.func @transform_9(%arg0: i32) -> (i32, i32) {
    %c0_i32 = arith.constant 0 : i32
    %c0_i32_0 = arith.constant 0 : i32
    %c0_i32_1 = arith.constant 0 : i32
    return %c0_i32, %c0_i32_0 : i32, i32
  }
  func.func @transform_10(%arg0: i32) -> (i32, i32) {
    %c0_i32 = arith.constant 0 : i32
    %c0_i32_0 = arith.constant 0 : i32
    return %arg0, %c0_i32 : i32, i32
  }
}

</mosaic_0001>

<llo_original>
// kernel: tpu_custom_call.1
$region0: #{tpu_custom_call.1}
  #allocation0 [shape = 'u32[]', space=smem, size = 0x4, offset = 0x4, fixed_abs, tag = 'smem constant byte address 0x4 - core index']
  #allocation1 [shape = 'u32[72,128]{1,0:T(1,128)}', space=vmem, size = 0x9000, scoped, tag = 'internal scratch']
  #allocation2 [shape = 'f32[8,8,384]{2,1,0:T(8,128)}', space=vmem, size = 0x18000, scoped, tag = 'scratch operand']
  #allocation3 [shape = 'f32[8,8,128]{2,1,0:T(8,128)}', space=vmem, size = 0x8000, scoped, tag = 'scratch operand']
  %s0 = inlined_call_operand.vmem [shape: f32[8,8,16], index: 0, kind: input, shape index: {}]
  %s1 = inlined_call_operand.vmem [shape: f32[8,8,1], index: 1, kind: input, shape index: {}]
  %s2 = inlined_call_operand.hbm [shape: f32[16,384], index: 2, kind: input, shape index: {}]
  %s3 = inlined_call_operand.hbm [shape: f32[128,384], index: 3, kind: input, shape index: {}]
  %s4 = inlined_call_operand.vmem [shape: f32[1,384], index: 4, kind: input, shape index: {}]
  %s5 = inlined_call_operand.vmem [shape: f32[1,128], index: 5, kind: input, shape index: {}]
  %s6 = inlined_call_operand.vmem [shape: f32[128,128], index: 6, kind: input, shape index: {}]
  %s7 = inlined_call_operand.vmem [shape: f32[128,128], index: 7, kind: input, shape index: {}]
  %s8 = inlined_call_operand.vmem [shape: f32[1,128], index: 8, kind: input, shape index: {}]
  %s9 = inlined_call_operand.vmem [shape: f32[256,16], index: 9, kind: input, shape index: {}]
  %s10 = inlined_call_operand.hbm [shape: f32[8,16], index: 10, kind: output, shape index: {}]
  %s11 = sld [smem:[#allocation0]]
  $region58: #{tpu_custom_call.1} parent=0
    _
  %s13 = ssub.s32 1, %s11
  %s14 = scalar_select 0, %s13, %s11
  $region1: #{tpu_custom_call.1} parent=0
    #allocation4 [shape = 'u8[24576]{0}', space=vmem, size = 0x6000, scoped, tag = 'input window, operand 2, single buffered']
    #allocation5 [shape = 's32[1]{0}', space=sflag, size = 0x4, scoped, tag = 'scoped memory for tpu_custom_call.1']
    #allocation6 [shape = 's32[1]{0}', space=sflag, size = 0x4, scoped, tag = 'scoped memory for tpu_custom_call.1']
    #allocation7 [shape = 'u8[196608]{0}', space=vmem, size = 0x30000, scoped, tag = 'input window, operand 3, single buffered']
    #allocation8 [shape = 's32[1]{0}', space=sflag, size = 0x4, scoped, tag = 'scoped memory for tpu_custom_call.1']
    #allocation9 [shape = 'u8[4096]{0}', space=vmem, size = 0x1000, scoped, tag = 'output window, operand 0, single buffered']
    %15 = vsyncpa [#allocation5], 0
    %16 = vsyncpa [#allocation8], 0
    %17 = vsyncpa [#allocation6], 0
    // Predicated region
    $region2: #{tpu_custom_call.1} parent=1 // pred_check
      _
    $region3: #{tpu_custom_call.1} parent=1 // pred_check_branch
      %19 = sbr.rel (0) target = $region5
    $region4: #{tpu_custom_call.1} parent=1 // pred_region
      _
    $region5: #{tpu_custom_call.1} parent=1 // pred_fallthru
      _
    // Predicated region
    $region6: #{tpu_custom_call.1} parent=1 // pred_check
      _
    $region7: #{tpu_custom_call.1} parent=1 // pred_check_branch
      %21 = sbr.rel (0) target = $region9
    $region8: #{tpu_custom_call.1} parent=1 // pred_region
      _
    $region9: #{tpu_custom_call.1} parent=1 // pred_fallthru
      _
    // Predicated region
    $region10: #{tpu_custom_call.1} parent=1 // pred_check
      _
    $region11: #{tpu_custom_call.1} parent=1 // pred_check_branch
      %23 = sbr.rel (0) target = $region13
    $region12: #{tpu_custom_call.1} parent=1 // pred_region
      %25 = vsyncadd [#allocation5], 0
      %s26 = sshll.u32 %s2, 4
      %s27 = int_to_ptr.hbm [resolvable:$true] %s26
      %s28 = sshll.u32 [#allocation4], 4
      %s29 = int_to_ptr.vmem [resolvable:$true] %s28
      %34 = dma.hbm_to_vmem [thread:$0]  %s27, 768, %s29, [#allocation5], 384, 384, 24
    $region13: #{tpu_custom_call.1} parent=1 // pred_fallthru
      _
    // Predicated region
    $region14: #{tpu_custom_call.1} parent=1 // pred_check
      _
    $region15: #{tpu_custom_call.1} parent=1 // pred_check_branch
      %36 = sbr.rel (0) target = $region17
    $region16: #{tpu_custom_call.1} parent=1 // pred_region
      %38 = vsyncadd [#allocation8], 0
      %s39 = sshll.u32 %s3, 4
      %s40 = int_to_ptr.hbm [resolvable:$true] %s39
      %s41 = sshll.u32 [#allocation7], 4
      %s42 = int_to_ptr.vmem [resolvable:$true] %s41
      %47 = dma.hbm_to_vmem [thread:$0]  %s40, 6144, %s42, [#allocation8], 384, 384, 24
    $region17: #{tpu_custom_call.1} parent=1 // pred_fallthru
      _
    // Predicated region
    $region18: #{tpu_custom_call.1} parent=1 // pred_check
      _
    $region19: #{tpu_custom_call.1} parent=1 // pred_check_branch
      %49 = sbr.rel (0) target = $region21
    $region20: #{tpu_custom_call.1} parent=1 // pred_region
      _
    $region21: #{tpu_custom_call.1} parent=1 // pred_fallthru
      _
    // Predicated region
    $region22: #{tpu_custom_call.1} parent=1 // pred_check
      _
    $region23: #{tpu_custom_call.1} parent=1 // pred_check_branch
      %51 = sbr.rel (0) target = $region25
    $region24: #{tpu_custom_call.1} parent=1 // pred_region
      _
    $region25: #{tpu_custom_call.1} parent=1 // pred_fallthru
      _
    // Predicated region
    $region26: #{tpu_custom_call.1} parent=1 // pred_check
      _
    $region27: #{tpu_custom_call.1} parent=1 // pred_check_branch
      %53 = sbr.rel (0) target = $region29
    $region28: #{tpu_custom_call.1} parent=1 // pred_region
      _
    $region29: #{tpu_custom_call.1} parent=1 // pred_fallthru
      _
    // Predicated region
    $region30: #{tpu_custom_call.1} parent=1 // pred_check
      _
    $region31: #{tpu_custom_call.1} parent=1 // pred_check_branch
      %55 = sbr.rel (0) target = $region33
    $region32: #{tpu_custom_call.1} parent=1 // pred_region
      _
    $region33: #{tpu_custom_call.1} parent=1 // pred_fallthru
      _
    // Predicated region
    $region34: #{tpu_custom_call.1} parent=1 // pred_check
      _
    $region35: #{tpu_custom_call.1} parent=1 // pred_check_branch
      %57 = sbr.rel (0) target = $region37
    $region36: #{tpu_custom_call.1} parent=1 // pred_region
      _
    $region37: #{tpu_custom_call.1} parent=1 // pred_fallthru
      _
    // Predicated region
    $region38: #{tpu_custom_call.1} parent=1 // pred_check
      _
    $region39: #{tpu_custom_call.1} parent=1 // pred_check_branch
      %59 = sbr.rel (0) target = $region41
    $region40: #{tpu_custom_call.1} parent=1 // pred_region
      _
    $region41: #{tpu_custom_call.1} parent=1 // pred_fallthru
      _
    // Predicated region
    $region42: #{tpu_custom_call.1} parent=1 // pred_check
      _
    $region43: #{tpu_custom_call.1} parent=1 // pred_check_branch
      %61 = sbr.rel (0) target = $region45
    $region44: #{tpu_custom_call.1} parent=1 // pred_region
      %63 = dma.done [#allocation5], 768
    $region45: #{tpu_custom_call.1} parent=1 // pred_fallthru
      _
    // Predicated region
    $region46: #{tpu_custom_call.1} parent=1 // pred_check
      _
    $region47: #{tpu_custom_call.1} parent=1 // pred_check_branch
      %65 = sbr.rel (0) target = $region49
    $region48: #{tpu_custom_call.1} parent=1 // pred_region
      %67 = dma.done [#allocation8], 6144
    $region49: #{tpu_custom_call.1} parent=1 // pred_fallthru
      _
    %v68 = vld [vmem:[%s0] sm:$0xff]
    %v69 = vld [vmem:[%s0 + $0x8] sm:$0xff]
    %v70 = vld [vmem:[%s0 + $0x10] sm:$0xff]
    %v71 = vld [vmem:[%s0 + $0x18] sm:$0xff]
    %v72 = vld [vmem:[%s0 + $0x20] sm:$0xff]
    %v73 = vld [vmem:[%s0 + $0x28] sm:$0xff]
    %v74 = vld [vmem:[%s0 + $0x30] sm:$0xff]
    %v75 = vld [vmem:[%s0 + $0x38] sm:$0xff]
    %v76 = vld [vmem:[#allocation4] sm:$0xff]
    %v77 = vld [vmem:[#allocation4 + $0x8] sm:$0xff]
    %v78 = vld [vmem:[#allocation4 + $0x10] sm:$0xff]
    %v79 = vld [vmem:[#allocation4 + $0x18] sm:$0xff]
    %v80 = vld [vmem:[#allocation4 + $0x20] sm:$0xff]
    %v81 = vld [vmem:[#allocation4 + $0x28] sm:$0xff]
    %v82 = vld [vmem:[%s4] sm:$0x7]
    %v84 = vperm.slane %v82, 0
    %v85 = vperm.slane %v82, 1
    %v86 = vperm.slane %v82, 2
    %vm90 = vcmask 130048
    %v92 = vsel %vm90, %v68, 0
    %v95 = vsel %vm90, %v69, 0
    %v98 = vsel %vm90, %v70, 0
    %v101 = vsel %vm90, %v71, 0
    %v104 = vsel %vm90, %v72, 0
    %v107 = vsel %vm90, %v73, 0
    %v110 = vsel %vm90, %v74, 0
    %v113 = vsel %vm90, %v75, 0
    %115 = vmatpush.msra.mxu0 0.0
    %116 = vmatpush.msra.mxu0 0.0
    %117 = vmatpush.msra.mxu0 0.0
    %118 = vmatpush.msra.mxu0 0.0
    %119 = vmatpush.msra.mxu0 0.0
    %120 = vmatpush.msra.mxu0 0.0
    %121 = vmatpush.msra.mxu0 0.0
    %122 = vmatpush.msra.mxu0 0.0
    %123 = vmatpush.msra.mxu0 0.0
    %124 = vmatpush.msra.mxu0 0.0
    %125 = vmatpush.msra.mxu0 0.0
    %126 = vmatpush.msra.mxu0 0.0
    %127 = vmatpush.msra.mxu0 0.0
    %128 = vmatpush.msra.mxu0 0.0
    %129 = vmatpush.msra.mxu0 %v79
    %130 = vmatpush.msra.mxu0 %v76
    %131 = vmatmul.f32.gmra.mxu0 %v92
    %v132 = vpop.f32.mrf.mxu0
    %v133 = vadd.f32 %v84, %v132
    %134 = vmatmul.f32.gmra.mxu0 %v95
    %v135 = vpop.f32.mrf.mxu0
    %v136 = vadd.f32 %v84, %v135
    %137 = vmatmul.f32.gmra.mxu0 %v98
    %v138 = vpop.f32.mrf.mxu0
    %v139 = vadd.f32 %v84, %v138
    %140 = vmatmul.f32.gmra.mxu0 %v101
    %v141 = vpop.f32.mrf.mxu0
    %v142 = vadd.f32 %v84, %v141
    %143 = vmatmul.f32.gmra.mxu0 %v104
    %v144 = vpop.f32.mrf.mxu0
    %v145 = vadd.f32 %v84, %v144
    %146 = vmatmul.f32.gmra.mxu0 %v107
    %v147 = vpop.f32.mrf.mxu0
    %v148 = vadd.f32 %v84, %v147
    %149 = vmatmul.f32.gmra.mxu0 %v110
    %v150 = vpop.f32.mrf.mxu0
    %v151 = vadd.f32 %v84, %v150
    %152 = vmatmul.f32.gmra.mxu0 %v113
    %v153 = vpop.f32.mrf.mxu0
    %v154 = vadd.f32 %v84, %v153
    %155 = vdwg.mxu0
    %156 = vmatpush.msra.mxu0 0.0
    %157 = vmatpush.msra.mxu0 0.0
    %158 = vmatpush.msra.mxu0 0.0
    %159 = vmatpush.msra.mxu0 0.0
    %160 = vmatpush.msra.mxu0 0.0
    %161 = vmatpush.msra.mxu0 0.0
    %162 = vmatpush.msra.mxu0 0.0
    %163 = vmatpush.msra.mxu0 0.0
    %164 = vmatpush.msra.mxu0 0.0
    %165 = vmatpush.msra.mxu0 0.0
    %166 = vmatpush.msra.mxu0 0.0
    %167 = vmatpush.msra.mxu0 0.0
    %168 = vmatpush.msra.mxu0 0.0
    %169 = vmatpush.msra.mxu0 0.0
    %170 = vmatpush.msra.mxu0 %v80
    %171 = vmatpush.msra.mxu0 %v77
    %172 = vmatmul.f32.gmra.mxu0 %v92
    %v173 = vpop.f32.mrf.mxu0
    %v174 = vadd.f32 %v85, %v173
    %175 = vmatmul.f32.gmra.mxu0 %v95
    %v176 = vpop.f32.mrf.mxu0
    %v177 = vadd.f32 %v85, %v176
    %178 = vmatmul.f32.gmra.mxu0 %v98
    %v179 = vpop.f32.mrf.mxu0
    %v180 = vadd.f32 %v85, %v179
    %181 = vmatmul.f32.gmra.mxu0 %v101
    %v182 = vpop.f32.mrf.mxu0
    %v183 = vadd.f32 %v85, %v182
    %184 = vmatmul.f32.gmra.mxu0 %v104
    %v185 = vpop.f32.mrf.mxu0
    %v186 = vadd.f32 %v85, %v185
    %187 = vmatmul.f32.gmra.mxu0 %v107
    %v188 = vpop.f32.mrf.mxu0
    %v189 = vadd.f32 %v85, %v188
    %190 = vmatmul.f32.gmra.mxu0 %v110
    %v191 = vpop.f32.mrf.mxu0
    %v192 = vadd.f32 %v85, %v191
    %193 = vmatmul.f32.gmra.mxu0 %v113
    %v194 = vpop.f32.mrf.mxu0
    %v195 = vadd.f32 %v85, %v194
    %196 = vdwg.mxu0
    %197 = vmatpush.msra.mxu0 0.0
    %198 = vmatpush.msra.mxu0 0.0
    %199 = vmatpush.msra.mxu0 0.0
    %200 = vmatpush.msra.mxu0 0.0
    %201 = vmatpush.msra.mxu0 0.0
    %202 = vmatpush.msra.mxu0 0.0
    %203 = vmatpush.msra.mxu0 0.0
    %204 = vmatpush.msra.mxu0 0.0
    %205 = vmatpush.msra.mxu0 0.0
    %206 = vmatpush.msra.mxu0 0.0
    %207 = vmatpush.msra.mxu0 0.0
    %208 = vmatpush.msra.mxu0 0.0
    %209 = vmatpush.msra.mxu0 0.0
    %210 = vmatpush.msra.mxu0 0.0
    %211 = vmatpush.msra.mxu0 %v81
    %212 = vmatpush.msra.mxu0 %v78
    %213 = vmatmul.f32.gmra.mxu0 %v92
    %v214 = vpop.f32.mrf.mxu0
    %v215 = vadd.f32 %v86, %v214
    %216 = vmatmul.f32.gmra.mxu0 %v95
    %v217 = vpop.f32.mrf.mxu0
    %v218 = vadd.f32 %v86, %v217
    %219 = vmatmul.f32.gmra.mxu0 %v98
    %v220 = vpop.f32.mrf.mxu0
    %v221 = vadd.f32 %v86, %v220
    %222 = vmatmul.f32.gmra.mxu0 %v101
    %v223 = vpop.f32.mrf.mxu0
    %v224 = vadd.f32 %v86, %v223
    %225 = vmatmul.f32.gmra.mxu0 %v104
    %v226 = vpop.f32.mrf.mxu0
    %v227 = vadd.f32 %v86, %v226
    %228 = vmatmul.f32.gmra.mxu0 %v107
    %v229 = vpop.f32.mrf.mxu0
    %v230 = vadd.f32 %v86, %v229
    %231 = vmatmul.f32.gmra.mxu0 %v110
    %v232 = vpop.f32.mrf.mxu0
    %v233 = vadd.f32 %v86, %v232
    %234 = vmatmul.f32.gmra.mxu0 %v113
    %v235 = vpop.f32.mrf.mxu0
    %v236 = vadd.f32 %v86, %v235
    %237 = vdwg.mxu0
    %238 = vst [vmem:[#allocation2] sm:$0xff] %v133
    %239 = vst [vmem:[#allocation2 + $0x8] sm:$0xff] %v174
    %240 = vst [vmem:[#allocation2 + $0x10] sm:$0xff] %v215
    %241 = vst [vmem:[#allocation2 + $0x18] sm:$0xff] %v136
    %242 = vst [vmem:[#allocation2 + $0x20] sm:$0xff] %v177
    %243 = vst [vmem:[#allocation2 + $0x28] sm:$0xff] %v218
    %244 = vst [vmem:[#allocation2 + $0x30] sm:$0xff] %v139
    %245 = vst [vmem:[#allocation2 + $0x38] sm:$0xff] %v180
    %246 = vst [vmem:[#allocation2 + $0x40] sm:$0xff] %v221
    %247 = vst [vmem:[#allocation2 + $0x48] sm:$0xff] %v142
    %248 = vst [vmem:[#allocation2 + $0x50] sm:$0xff] %v183
    %249 = vst [vmem:[#allocation2 + $0x58] sm:$0xff] %v224
    %250 = vst [vmem:[#allocation2 + $0x60] sm:$0xff] %v145
    %251 = vst [vmem:[#allocation2 + $0x68] sm:$0xff] %v186
    %252 = vst [vmem:[#allocation2 + $0x70] sm:$0xff] %v227
    %253 = vst [vmem:[#allocation2 + $0x78] sm:$0xff] %v148
    %254 = vst [vmem:[#allocation2 + $0x80] sm:$0xff] %v189
    %255 = vst [vmem:[#allocation2 + $0x88] sm:$0xff] %v230
    %256 = vst [vmem:[#allocation2 + $0x90] sm:$0xff] %v151
    %257 = vst [vmem:[#allocation2 + $0x98] sm:$0xff] %v192
    %258 = vst [vmem:[#allocation2 + $0xa0] sm:$0xff] %v233
    %259 = vst [vmem:[#allocation2 + $0xa8] sm:$0xff] %v154
    %260 = vst [vmem:[#allocation2 + $0xb0] sm:$0xff] %v195
    %261 = vst [vmem:[#allocation2 + $0xb8] sm:$0xff] %v236
    %v262 = vld [vmem:[#allocation7] sm:$0xff]
    %v263 = vld [vmem:[#allocation7 + $0x8] sm:$0xff]
    %v264 = vld [vmem:[#allocation7 + $0x10] sm:$0xff]
    %v265 = vld [vmem:[#allocation7 + $0x18] sm:$0xff]
    %v266 = vld [vmem:[#allocation7 + $0x20] sm:$0xff]
    %v267 = vld [vmem:[#allocation7 + $0x28] sm:$0xff]
    %v268 = vld [vmem:[#allocation7 + $0x30] sm:$0xff]
    %v269 = vld [vmem:[#allocation7 + $0x38] sm:$0xff]
    %v270 = vld [vmem:[#allocation7 + $0x40] sm:$0xff]
    %v271 = vld [vmem:[#allocation7 + $0x48] sm:$0xff]
    %v272 = vld [vmem:[#allocation7 + $0x50] sm:$0xff]
    %v273 = vld [vmem:[#allocation7 + $0x58] sm:$0xff]
    %v274 = vld [vmem:[#allocation7 + $0x60] sm:$0xff]
    %v275 = vld [vmem:[#allocation7 + $0x68] sm:$0xff]
    %v276 = vld [vmem:[#allocation7 + $0x70] sm:$0xff]
    %v277 = vld [vmem:[#allocation7 + $0x78] sm:$0xff]
    %v278 = vld [vmem:[#allocation7 + $0x80] sm:$0xff]
    %v279 = vld [vmem:[#allocation7 + $0x88] sm:$0xff]
    %v280 = vld [vmem:[#allocation7 + $0x90] sm:$0xff]
    %v281 = vld [vmem:[#allocation7 + $0x98] sm:$0xff]
    %v282 = vld [vmem:[#allocation7 + $0xa0] sm:$0xff]
    %v283 = vld [vmem:[#allocation7 + $0xa8] sm:$0xff]
    %v284 = vld [vmem:[#allocation7 + $0xb0] sm:$0xff]
    %v285 = vld [vmem:[#allocation7 + $0xb8] sm:$0xff]
    %v286 = vld [vmem:[#allocation7 + $0xc0] sm:$0xff]
    %v287 = vld [vmem:[#allocation7 + $0xc8] sm:$0xff]
    %v288 = vld [vmem:[#allocation7 + $0xd0] sm:$0xff]
    %v289 = vld [vmem:[#allocation7 + $0xd8] sm:$0xff]
    %v290 = vld [vmem:[#allocation7 + $0xe0] sm:$0xff]
    %v291 = vld [vmem:[#allocation7 + $0xe8] sm:$0xff]
    %v292 = vld [vmem:[#allocation7 + $0xf0] sm:$0xff]
    %v293 = vld [vmem:[#allocation7 + $0xf8] sm:$0xff]
    %v294 = vld [vmem:[#allocation7 + $0x100] sm:$0xff]
    %v295 = vld [vmem:[#allocation7 + $0x108] sm:$0xff]
    %v296 = vld [vmem:[#allocation7 + $0x110] sm:$0xff]
    %v297 = vld [vmem:[#allocation7 + $0x118] sm:$0xff]
    %v298 = vld [vmem:[#allocation7 + $0x120] sm:$0xff]
    %v299 = vld [vmem:[#allocation7 + $0x128] sm:$0xff]
    %v300 = vld [vmem:[#allocation7 + $0x130] sm:$0xff]
    %v301 = vld [vmem:[#allocation7 + $0x138] sm:$0xff]
    %v302 = vld [vmem:[#allocation7 + $0x140] sm:$0xff]
    %v303 = vld [vmem:[#allocation7 + $0x148] sm:$0xff]
    %v304 = vld [vmem:[#allocation7 + $0x150] sm:$0xff]
    %v305 = vld [vmem:[#allocation7 + $0x158] sm:$0xff]
    %v306 = vld [vmem:[#allocation7 + $0x160] sm:$0xff]
    %v307 = vld [vmem:[#allocation7 + $0x168] sm:$0xff]
    %v308 = vld [vmem:[#allocation7 + $0x170] sm:$0xff]
    %v309 = vld [vmem:[#allocation7 + $0x178] sm:$0xff]
    %v310 = vld [vmem:[%s5] sm:$0x1]
    %v312 = vperm.slane %v310, 0
    %v314 = vld [vmem:[#allocation2] sm:$0xff]
    %v315 = vld [vmem:[#allocation2 + $0x8] sm:$0xff]
    %v316 = vld [vmem:[#allocation2 + $0x10] sm:$0xff]
    %v317 = vld [vmem:[%s1] sm:$0xff]
    %318 = vmatpush.msra.mxu0 %v307
    %319 = vmatpush.msra.mxu0 %v304
    %320 = vmatpush.msra.mxu0 %v301
    %321 = vmatpush.msra.mxu0 %v298
    %322 = vmatpush.msra.mxu0 %v295
    %323 = vmatpush.msra.mxu0 %v292
    %324 = vmatpush.msra.mxu0 %v289
    %325 = vmatpush.msra.mxu0 %v286
    %326 = vmatpush.msra.mxu0 %v283
    %327 = vmatpush.msra.mxu0 %v280
    %328 = vmatpush.msra.mxu0 %v277
    %329 = vmatpush.msra.mxu0 %v274
    %330 = vmatpush.msra.mxu0 %v271
    %331 = vmatpush.msra.mxu0 %v268
    %332 = vmatpush.msra.mxu0 %v265
    %333 = vmatpush.msra.mxu0 %v262
    %334 = vmatmul.f32.gmra.mxu0 0.0
    %v335 = vpop.f32.mrf.mxu0
    %v336 = vadd.f32 0.0, %v335
    %337 = vdwg.mxu0
    %338 = vmatpush.msra.mxu0 %v308
    %339 = vmatpush.msra.mxu0 %v305
    %340 = vmatpush.msra.mxu0 %v302
    %341 = vmatpush.msra.mxu0 %v299
    %342 = vmatpush.msra.mxu0 %v296
    %343 = vmatpush.msra.mxu0 %v293
    %344 = vmatpush.msra.mxu0 %v290
    %345 = vmatpush.msra.mxu0 %v287
    %346 = vmatpush.msra.mxu0 %v284
    %347 = vmatpush.msra.mxu0 %v281
    %348 = vmatpush.msra.mxu0 %v278
    %349 = vmatpush.msra.mxu0 %v275
    %350 = vmatpush.msra.mxu0 %v272
    %351 = vmatpush.msra.mxu0 %v269
    %352 = vmatpush.msra.mxu0 %v266
    %353 = vmatpush.msra.mxu0 %v263
    %354 = vmatmul.f32.gmra.mxu0 0.0
    %v355 = vpop.f32.mrf.mxu0
    %v356 = vadd.f32 0.0, %v355
    %357 = vdwg.mxu0
    %358 = vmatpush.msra.mxu0 %v309
    %359 = vmatpush.msra.mxu0 %v306
    %360 = vmatpush.msra.mxu0 %v303
    %361 = vmatpush.msra.mxu0 %v300
    %362 = vmatpush.msra.mxu0 %v297
    %363 = vmatpush.msra.mxu0 %v294
    %364 = vmatpush.msra.mxu0 %v291
    %365 = vmatpush.msra.mxu0 %v288
    %366 = vmatpush.msra.mxu0 %v285
    %367 = vmatpush.msra.mxu0 %v282
    %368 = vmatpush.msra.mxu0 %v279
    %369 = vmatpush.msra.mxu0 %v276
    %370 = vmatpush.msra.mxu0 %v273
    %371 = vmatpush.msra.mxu0 %v270
    %372 = vmatpush.msra.mxu0 %v267
    %373 = vmatpush.msra.mxu0 %v264
    %374 = vmatmul.f32.gmra.mxu0 0.0
    %v375 = vpop.f32.mrf.mxu0
    %v376 = vadd.f32 0.0, %v375
    %377 = vdwg.mxu0
    %v378 = vadd.f32 %v314, %v336
    %v379 = vxor.u32 %v378, 2147483648
    %v380 = vmul.f32 %v379, 1.442695
    %v381 = vpow.pop %v380
    %v382 = vadd.f32 %v381, 1.0
    %v383 = vrcp.pop %v382
    %v384 = vmul.f32 %v382, %v383
    %v385 = vsub.f32 1.0, %v384
    %v386 = vmul.f32 %v383, %v385
    %v387 = vadd.f32 %v383, %v386
    %vm388 = vweird.f32 %v382
    %vm389 = vweird.f32 %v383
    %vm390 = vmor %vm388, %vm389
    %v391 = vsel %vm390, %v383, %v387
    %v392 = vand.u32 2147483647, %v382
    %vm393 = vcmp.eq.f32.partialorder %v392, 8.507059e+37
    %v394 = vand.u32 %v382, 2147483648
    %v395 = vor.u32 1.1754944e-38, %v394
    %v396 = vsel %vm393, %v395, %v391
    %v397 = vmul.f32 1.0, %v396
    %v398 = vadd.f32 %v315, %v356
    %v399 = vxor.u32 %v398, 2147483648
    %v400 = vmul.f32 %v399, 1.442695
    %v401 = vpow.pop %v400
    %v402 = vadd.f32 %v401, 1.0
    %v403 = vrcp.pop %v402
    %v404 = vmul.f32 %v402, %v403
    %v405 = vsub.f32 1.0, %v404
    %v406 = vmul.f32 %v403, %v405
    %v407 = vadd.f32 %v403, %v406
    %vm408 = vweird.f32 %v402
    %vm409 = vweird.f32 %v403
    %vm410 = vmor %vm408, %vm409
    %v411 = vsel %vm410, %v403, %v407
    %v412 = vand.u32 2147483647, %v402
    %vm413 = vcmp.eq.f32.partialorder %v412, 8.507059e+37
    %v414 = vand.u32 %v402, 2147483648
    %v415 = vor.u32 1.1754944e-38, %v414
    %v416 = vsel %vm413, %v415, %v411
    %v417 = vmul.f32 1.0, %v416
    %v418 = vadd.f32 %v376, %v312
    %v419 = vmul.f32 %v397, %v418
    %v420 = vadd.f32 %v316, %v419
    %v421 = vtanh.pop %v420
    %v422 = vsub.f32 0.0, %v421
    %v423 = vmul.f32 %v417, %v422
    %v424 = vadd.f32 %v421, %v423
    %426 = vset.pattern.permute.xlu0 0
    %427 = vperm.xlu0 %426, %v317
    %v428 = vpop.permute.xlu0 %427
    %v430 = vmul.f32 %v428, %v424
    %431 = vst [vmem:[#allocation3] sm:$0xff] %v430
    %v432 = vadd.f32 %v430, 0.0
    %s433 = scalar_lea.vmem [#allocation2], 24
    %v434 = vld [vmem:[%s433] sm:$0xff]
    %v435 = vld [vmem:[%s433 + $0x8] sm:$0xff]
    %v436 = vld [vmem:[%s433 + $0x10] sm:$0xff]
    %s437 = scalar_lea.vmem %s1, 8
    %v438 = vld [vmem:[%s437] sm:$0xff]
    %439 = vmatpush.msra.mxu0 %v307
    %440 = vmatpush.msra.mxu0 %v304
    %441 = vmatpush.msra.mxu0 %v301
    %442 = vmatpush.msra.mxu0 %v298
    %443 = vmatpush.msra.mxu0 %v295
    %444 = vmatpush.msra.mxu0 %v292
    %445 = vmatpush.msra.mxu0 %v289
    %446 = vmatpush.msra.mxu0 %v286
    %447 = vmatpush.msra.mxu0 %v283
    %448 = vmatpush.msra.mxu0 %v280
    %449 = vmatpush.msra.mxu0 %v277
    %450 = vmatpush.msra.mxu0 %v274
    %451 = vmatpush.msra.mxu0 %v271
    %452 = vmatpush.msra.mxu0 %v268
    %453 = vmatpush.msra.mxu0 %v265
    %454 = vmatpush.msra.mxu0 %v262
    %455 = vmatmul.f32.gmra.mxu0 %v432
    %v456 = vpop.f32.mrf.mxu0
    %v457 = vadd.f32 0.0, %v456
    %458 = vdwg.mxu0
    %459 = vmatpush.msra.mxu0 %v308
    %460 = vmatpush.msra.mxu0 %v305
    %461 = vmatpush.msra.mxu0 %v302
    %462 = vmatpush.msra.mxu0 %v299
    %463 = vmatpush.msra.mxu0 %v296
    %464 = vmatpush.msra.mxu0 %v293
    %465 = vmatpush.msra.mxu0 %v290
    %466 = vmatpush.msra.mxu0 %v287
    %467 = vmatpush.msra.mxu0 %v284
    %468 = vmatpush.msra.mxu0 %v281
    %469 = vmatpush.msra.mxu0 %v278
    %470 = vmatpush.msra.mxu0 %v275
    %471 = vmatpush.msra.mxu0 %v272
    %472 = vmatpush.msra.mxu0 %v269
    %473 = vmatpush.msra.mxu0 %v266
    %474 = vmatpush.msra.mxu0 %v263
    %475 = vmatmul.f32.gmra.mxu0 %v432
    %v476 = vpop.f32.mrf.mxu0
    %v477 = vadd.f32 0.0, %v476
    %478 = vdwg.mxu0
    %479 = vmatpush.msra.mxu0 %v309
    %480 = vmatpush.msra.mxu0 %v306
    %481 = vmatpush.msra.mxu0 %v303
    %482 = vmatpush.msra.mxu0 %v300
    %483 = vmatpush.msra.mxu0 %v297
    %484 = vmatpush.msra.mxu0 %v294
    %485 = vmatpush.msra.mxu0 %v291
    %486 = vmatpush.msra.mxu0 %v288
    %487 = vmatpush.msra.mxu0 %v285
    %488 = vmatpush.msra.mxu0 %v282
    %489 = vmatpush.msra.mxu0 %v279
    %490 = vmatpush.msra.mxu0 %v276
    %491 = vmatpush.msra.mxu0 %v273
    %492 = vmatpush.msra.mxu0 %v270
    %493 = vmatpush.msra.mxu0 %v267
    %494 = vmatpush.msra.mxu0 %v264
    %495 = vmatmul.f32.gmra.mxu0 %v432
    %v496 = vpop.f32.mrf.mxu0
    %v497 = vadd.f32 0.0, %v496
    %498 = vdwg.mxu0
    %v499 = vadd.f32 %v434, %v457
    %v500 = vxor.u32 %v499, 2147483648
    %v501 = vmul.f32 %v500, 1.442695
    %v502 = vpow.pop %v501
    %v503 = vadd.f32 %v502, 1.0
    %v504 = vrcp.pop %v503
    %v505 = vmul.f32 %v503, %v504
    %v506 = vsub.f32 1.0, %v505
    %v507 = vmul.f32 %v504, %v506
    %v508 = vadd.f32 %v504, %v507
    %vm509 = vweird.f32 %v503
    %vm510 = vweird.f32 %v504
    %vm511 = vmor %vm509, %vm510
    %v512 = vsel %vm511, %v504, %v508
    %v513 = vand.u32 2147483647, %v503
    %vm514 = vcmp.eq.f32.partialorder %v513, 8.507059e+37
    %v515 = vand.u32 %v503, 2147483648
    %v516 = vor.u32 1.1754944e-38, %v515
    %v517 = vsel %vm514, %v516, %v512
    %v518 = vmul.f32 1.0, %v517
    %v519 = vadd.f32 %v435, %v477
    %v520 = vxor.u32 %v519, 2147483648
    %v521 = vmul.f32 %v520, 1.442695
    %v522 = vpow.pop %v521
    %v523 = vadd.f32 %v522, 1.0
    %v524 = vrcp.pop %v523
    %v525 = vmul.f32 %v523, %v524
    %v526 = vsub.f32 1.0, %v525
    %v527 = vmul.f32 %v524, %v526
    %v528 = vadd.f32 %v524, %v527
    %vm529 = vweird.f32 %v523
    %vm530 = vweird.f32 %v524
    %vm531 = vmor %vm529, %vm530
    %v532 = vsel %vm531, %v524, %v528
    %v533 = vand.u32 2147483647, %v523
    %vm534 = vcmp.eq.f32.partialorder %v533, 8.507059e+37
    %v535 = vand.u32 %v523, 2147483648
    %v536 = vor.u32 1.1754944e-38, %v535
    %v537 = vsel %vm534, %v536, %v532
    %v538 = vmul.f32 1.0, %v537
    %v539 = vadd.f32 %v497, %v312
    %v540 = vmul.f32 %v518, %v539
    %v541 = vadd.f32 %v436, %v540
    %v542 = vtanh.pop %v541
    %v543 = vsub.f32 %v432, %v542
    %v544 = vmul.f32 %v538, %v543
    %v545 = vadd.f32 %v542, %v544
    %547 = vset.pattern.permute.xlu0 0
    %548 = vperm.xlu0 %547, %v438
    %v549 = vpop.permute.xlu0 %548
    %v551 = vmul.f32 %v549, %v545
    %s552 = scalar_lea.vmem [#allocation3], 8
    %553 = vst [vmem:[%s552] sm:$0xff] %v551
    %v554 = vsub.f32 %v545, %v432
    %v555 = vmul.f32 %v549, %v554
    %v556 = vadd.f32 %v432, %v555
    %s557 = scalar_lea.vmem [#allocation2], 48
    %v558 = vld [vmem:[%s557] sm:$0xff]
    %v559 = vld [vmem:[%s557 + $0x8] sm:$0xff]
    %v560 = vld [vmem:[%s557 + $0x10] sm:$0xff]
    %s561 = scalar_lea.vmem %s1, 16
    %v562 = vld [vmem:[%s561] sm:$0xff]
    %563 = vmatpush.msra.mxu0 %v307
    %564 = vmatpush.msra.mxu0 %v304
    %565 = vmatpush.msra.mxu0 %v301
    %566 = vmatpush.msra.mxu0 %v298
    %567 = vmatpush.msra.mxu0 %v295
    %568 = vmatpush.msra.mxu0 %v292
    %569 = vmatpush.msra.mxu0 %v289
    %570 = vmatpush.msra.mxu0 %v286
    %571 = vmatpush.msra.mxu0 %v283
    %572 = vmatpush.msra.mxu0 %v280
    %573 = vmatpush.msra.mxu0 %v277
    %574 = vmatpush.msra.mxu0 %v274
    %575 = vmatpush.msra.mxu0 %v271
    %576 = vmatpush.msra.mxu0 %v268
    %577 = vmatpush.msra.mxu0 %v265
    %578 = vmatpush.msra.mxu0 %v262
    %579 = vmatmul.f32.gmra.mxu0 %v556
    %v580 = vpop.f32.mrf.mxu0
    %v581 = vadd.f32 0.0, %v580
    %582 = vdwg.mxu0
    %583 = vmatpush.msra.mxu0 %v308
    %584 = vmatpush.msra.mxu0 %v305
    %585 = vmatpush.msra.mxu0 %v302
    %586 = vmatpush.msra.mxu0 %v299
    %587 = vmatpush.msra.mxu0 %v296
    %588 = vmatpush.msra.mxu0 %v293
    %589 = vmatpush.msra.mxu0 %v290
    %590 = vmatpush.msra.mxu0 %v287
    %591 = vmatpush.msra.mxu0 %v284
    %592 = vmatpush.msra.mxu0 %v281
    %593 = vmatpush.msra.mxu0 %v278
    %594 = vmatpush.msra.mxu0 %v275
    %595 = vmatpush.msra.mxu0 %v272
    %596 = vmatpush.msra.mxu0 %v269
    %597 = vmatpush.msra.mxu0 %v266
    %598 = vmatpush.msra.mxu0 %v263
    %599 = vmatmul.f32.gmra.mxu0 %v556
    %v600 = vpop.f32.mrf.mxu0
    %v601 = vadd.f32 0.0, %v600
    %602 = vdwg.mxu0
    %603 = vmatpush.msra.mxu0 %v309
    %604 = vmatpush.msra.mxu0 %v306
    %605 = vmatpush.msra.mxu0 %v303
    %606 = vmatpush.msra.mxu0 %v300
    %607 = vmatpush.msra.mxu0 %v297
    %608 = vmatpush.msra.mxu0 %v294
    %609 = vmatpush.msra.mxu0 %v291
    %610 = vmatpush.msra.mxu0 %v288
    %611 = vmatpush.msra.mxu0 %v285
    %612 = vmatpush.msra.mxu0 %v282
    %613 = vmatpush.msra.mxu0 %v279
    %614 = vmatpush.msra.mxu0 %v276
    %615 = vmatpush.msra.mxu0 %v273
    %616 = vmatpush.msra.mxu0 %v270
    %617 = vmatpush.msra.mxu0 %v267
    %618 = vmatpush.msra.mxu0 %v264
    %619 = vmatmul.f32.gmra.mxu0 %v556
    %v620 = vpop.f32.mrf.mxu0
    %v621 = vadd.f32 0.0, %v620
    %622 = vdwg.mxu0
    %v623 = vadd.f32 %v558, %v581
    %v624 = vxor.u32 %v623, 2147483648
    %v625 = vmul.f32 %v624, 1.442695
    %v626 = vpow.pop %v625
    %v627 = vadd.f32 %v626, 1.0
    %v628 = vrcp.pop %v627
    %v629 = vmul.f32 %v627, %v628
    %v630 = vsub.f32 1.0, %v629
    %v631 = vmul.f32 %v628, %v630
    %v632 = vadd.f32 %v628, %v631
    %vm633 = vweird.f32 %v627
    %vm634 = vweird.f32 %v628
    %vm635 = vmor %vm633, %vm634
    %v636 = vsel %vm635, %v628, %v632
    %v637 = vand.u32 2147483647, %v627
    %vm638 = vcmp.eq.f32.partialorder %v637, 8.507059e+37
    %v639 = vand.u32 %v627, 2147483648
    %v640 = vor.u32 1.1754944e-38, %v639
    %v641 = vsel %vm638, %v640, %v636
    %v642 = vmul.f32 1.0, %v641
    %v643 = vadd.f32 %v559, %v601
    %v644 = vxor.u32 %v643, 2147483648
    %v645 = vmul.f32 %v644, 1.442695
    %v646 = vpow.pop %v645
    %v647 = vadd.f32 %v646, 1.0
    %v648 = vrcp.pop %v647
    %v649 = vmul.f32 %v647, %v648
    %v650 = vsub.f32 1.0, %v649
    %v651 = vmul.f32 %v648, %v650
    %v652 = vadd.f32 %v648, %v651
    %vm653 = vweird.f32 %v647
    %vm654 = vweird.f32 %v648
    %vm655 = vmor %vm653, %vm654
    %v656 = vsel %vm655, %v648, %v652
    %v657 = vand.u32 2147483647, %v647
    %vm658 = vcmp.eq.f32.partialorder %v657, 8.507059e+37
    %v659 = vand.u32 %v647, 2147483648
    %v660 = vor.u32 1.1754944e-38, %v659
    %v661 = vsel %vm658, %v660, %v656
    %v662 = vmul.f32 1.0, %v661
    %v663 = vadd.f32 %v621, %v312
    %v664 = vmul.f32 %v642, %v663
    %v665 = vadd.f32 %v560, %v664
    %v666 = vtanh.pop %v665
    %v667 = vsub.f32 %v556, %v666
    %v668 = vmul.f32 %v662, %v667
    %v669 = vadd.f32 %v666, %v668
    %671 = vset.pattern.permute.xlu0 0
    %672 = vperm.xlu0 %671, %v562
    %v673 = vpop.permute.xlu0 %672
    %v675 = vmul.f32 %v673, %v669
    %s676 = scalar_lea.vmem [#allocation3], 16
    %677 = vst [vmem:[%s676] sm:$0xff] %v675
    %v678 = vsub.f32 %v669, %v556
    %v679 = vmul.f32 %v673, %v678
    %v680 = vadd.f32 %v556, %v679
    %s681 = scalar_lea.vmem [#allocation2], 72
    %v682 = vld [vmem:[%s681] sm:$0xff]
    %v683 = vld [vmem:[%s681 + $0x8] sm:$0xff]
    %v684 = vld [vmem:[%s681 + $0x10] sm:$0xff]
    %s685 = scalar_lea.vmem %s1, 24
    %v686 = vld [vmem:[%s685] sm:$0xff]
    %687 = vmatpush.msra.mxu0 %v307
    %688 = vmatpush.msra.mxu0 %v304
    %689 = vmatpush.msra.mxu0 %v301
    %690 = vmatpush.msra.mxu0 %v298
    %691 = vmatpush.msra.mxu0 %v295
    %692 = vmatpush.msra.mxu0 %v292
    %693 = vmatpush.msra.mxu0 %v289
    %694 = vmatpush.msra.mxu0 %v286
    %695 = vmatpush.msra.mxu0 %v283
    %696 = vmatpush.msra.mxu0 %v280
    %697 = vmatpush.msra.mxu0 %v277
    %698 = vmatpush.msra.mxu0 %v274
    %699 = vmatpush.msra.mxu0 %v271
    %700 = vmatpush.msra.mxu0 %v268
    %701 = vmatpush.msra.mxu0 %v265
    %702 = vmatpush.msra.mxu0 %v262
    %703 = vmatmul.f32.gmra.mxu0 %v680
    %v704 = vpop.f32.mrf.mxu0
    %v705 = vadd.f32 0.0, %v704
    %706 = vdwg.mxu0
    %707 = vmatpush.msra.mxu0 %v308
    %708 = vmatpush.msra.mxu0 %v305
    %709 = vmatpush.msra.mxu0 %v302
    %710 = vmatpush.msra.mxu0 %v299
    %711 = vmatpush.msra.mxu0 %v296
    %712 = vmatpush.msra.mxu0 %v293
    %713 = vmatpush.msra.mxu0 %v290
    %714 = vmatpush.msra.mxu0 %v287
    %715 = vmatpush.msra.mxu0 %v284
    %716 = vmatpush.msra.mxu0 %v281
    %717 = vmatpush.msra.mxu0 %v278
    %718 = vmatpush.msra.mxu0 %v275
    %719 = vmatpush.msra.mxu0 %v272
    %720 = vmatpush.msra.mxu0 %v269
    %721 = vmatpush.msra.mxu0 %v266
    %722 = vmatpush.msra.mxu0 %v263
    %723 = vmatmul.f32.gmra.mxu0 %v680
    %v724 = vpop.f32.mrf.mxu0
    %v725 = vadd.f32 0.0, %v724
    %726 = vdwg.mxu0
    %727 = vmatpush.msra.mxu0 %v309
    %728 = vmatpush.msra.mxu0 %v306
    %729 = vmatpush.msra.mxu0 %v303
    %730 = vmatpush.msra.mxu0 %v300
    %731 = vmatpush.msra.mxu0 %v297
    %732 = vmatpush.msra.mxu0 %v294
    %733 = vmatpush.msra.mxu0 %v291
    %734 = vmatpush.msra.mxu0 %v288
    %735 = vmatpush.msra.mxu0 %v285
    %736 = vmatpush.msra.mxu0 %v282
    %737 = vmatpush.msra.mxu0 %v279
    %738 = vmatpush.msra.mxu0 %v276
    %739 = vmatpush.msra.mxu0 %v273
    %740 = vmatpush.msra.mxu0 %v270
    %741 = vmatpush.msra.mxu0 %v267
    %742 = vmatpush.msra.mxu0 %v264
    %743 = vmatmul.f32.gmra.mxu0 %v680
    %v744 = vpop.f32.mrf.mxu0
    %v745 = vadd.f32 0.0, %v744
    %746 = vdwg.mxu0
    %v747 = vadd.f32 %v682, %v705
    %v748 = vxor.u32 %v747, 2147483648
    %v749 = vmul.f32 %v748, 1.442695
    %v750 = vpow.pop %v749
    %v751 = vadd.f32 %v750, 1.0
    %v752 = vrcp.pop %v751
    %v753 = vmul.f32 %v751, %v752
    %v754 = vsub.f32 1.0, %v753
    %v755 = vmul.f32 %v752, %v754
    %v756 = vadd.f32 %v752, %v755
    %vm757 = vweird.f32 %v751
    %vm758 = vweird.f32 %v752
    %vm759 = vmor %vm757, %vm758
    %v760 = vsel %vm759, %v752, %v756
    %v761 = vand.u32 2147483647, %v751
    %vm762 = vcmp.eq.f32.partialorder %v761, 8.507059e+37
    %v763 = vand.u32 %v751, 2147483648
    %v764 = vor.u32 1.1754944e-38, %v763
    %v765 = vsel %vm762, %v764, %v760
    %v766 = vmul.f32 1.0, %v765
    %v767 = vadd.f32 %v683, %v725
    %v768 = vxor.u32 %v767, 2147483648
    %v769 = vmul.f32 %v768, 1.442695
    %v770 = vpow.pop %v769
    %v771 = vadd.f32 %v770, 1.0
    %v772 = vrcp.pop %v771
    %v773 = vmul.f32 %v771, %v772
    %v774 = vsub.f32 1.0, %v773
    %v775 = vmul.f32 %v772, %v774
    %v776 = vadd.f32 %v772, %v775
    %vm777 = vweird.f32 %v771
    %vm778 = vweird.f32 %v772
    %vm779 = vmor %vm777, %vm778
    %v780 = vsel %vm779, %v772, %v776
    %v781 = vand.u32 2147483647, %v771
    %vm782 = vcmp.eq.f32.partialorder %v781, 8.507059e+37
    %v783 = vand.u32 %v771, 2147483648
    %v784 = vor.u32 1.1754944e-38, %v783
    %v785 = vsel %vm782, %v784, %v780
    %v786 = vmul.f32 1.0, %v785
    %v787 = vadd.f32 %v745, %v312
    %v788 = vmul.f32 %v766, %v787
    %v789 = vadd.f32 %v684, %v788
    %v790 = vtanh.pop %v789
    %v791 = vsub.f32 %v680, %v790
    %v792 = vmul.f32 %v786, %v791
    %v793 = vadd.f32 %v790, %v792
    %795 = vset.pattern.permute.xlu0 0
    %796 = vperm.xlu0 %795, %v686
    %v797 = vpop.permute.xlu0 %796
    %v799 = vmul.f32 %v797, %v793
    %s800 = scalar_lea.vmem [#allocation3], 24
    %801 = vst [vmem:[%s800] sm:$0xff] %v799
    %v802 = vsub.f32 %v793, %v680
    %v803 = vmul.f32 %v797, %v802
    %v804 = vadd.f32 %v680, %v803
    %s805 = scalar_lea.vmem [#allocation2], 96
    %v806 = vld [vmem:[%s805] sm:$0xff]
    %v807 = vld [vmem:[%s805 + $0x8] sm:$0xff]
    %v808 = vld [vmem:[%s805 + $0x10] sm:$0xff]
    %s809 = scalar_lea.vmem %s1, 32
    %v810 = vld [vmem:[%s809] sm:$0xff]
    %811 = vmatpush.msra.mxu0 %v307
    %812 = vmatpush.msra.mxu0 %v304
    %813 = vmatpush.msra.mxu0 %v301
    %814 = vmatpush.msra.mxu0 %v298
    %815 = vmatpush.msra.mxu0 %v295
    %816 = vmatpush.msra.mxu0 %v292
    %817 = vmatpush.msra.mxu0 %v289
    %818 = vmatpush.msra.mxu0 %v286
    %819 = vmatpush.msra.mxu0 %v283
    %820 = vmatpush.msra.mxu0 %v280
    %821 = vmatpush.msra.mxu0 %v277
    %822 = vmatpush.msra.mxu0 %v274
    %823 = vmatpush.msra.mxu0 %v271
    %824 = vmatpush.msra.mxu0 %v268
    %825 = vmatpush.msra.mxu0 %v265
    %826 = vmatpush.msra.mxu0 %v262
    %827 = vmatmul.f32.gmra.mxu0 %v804
    %v828 = vpop.f32.mrf.mxu0
    %v829 = vadd.f32 0.0, %v828
    %830 = vdwg.mxu0
    %831 = vmatpush.msra.mxu0 %v308
    %832 = vmatpush.msra.mxu0 %v305
    %833 = vmatpush.msra.mxu0 %v302
    %834 = vmatpush.msra.mxu0 %v299
    %835 = vmatpush.msra.mxu0 %v296
    %836 = vmatpush.msra.mxu0 %v293
    %837 = vmatpush.msra.mxu0 %v290
    %838 = vmatpush.msra.mxu0 %v287
    %839 = vmatpush.msra.mxu0 %v284
    %840 = vmatpush.msra.mxu0 %v281
    %841 = vmatpush.msra.mxu0 %v278
    %842 = vmatpush.msra.mxu0 %v275
    %843 = vmatpush.msra.mxu0 %v272
    %844 = vmatpush.msra.mxu0 %v269
    %845 = vmatpush.msra.mxu0 %v266
    %846 = vmatpush.msra.mxu0 %v263
    %847 = vmatmul.f32.gmra.mxu0 %v804
    %v848 = vpop.f32.mrf.mxu0
    %v849 = vadd.f32 0.0, %v848
    %850 = vdwg.mxu0
    %851 = vmatpush.msra.mxu0 %v309
    %852 = vmatpush.msra.mxu0 %v306
    %853 = vmatpush.msra.mxu0 %v303
    %854 = vmatpush.msra.mxu0 %v300
    %855 = vmatpush.msra.mxu0 %v297
    %856 = vmatpush.msra.mxu0 %v294
    %857 = vmatpush.msra.mxu0 %v291
    %858 = vmatpush.msra.mxu0 %v288
    %859 = vmatpush.msra.mxu0 %v285
    %860 = vmatpush.msra.mxu0 %v282
    %861 = vmatpush.msra.mxu0 %v279
    %862 = vmatpush.msra.mxu0 %v276
    %863 = vmatpush.msra.mxu0 %v273
    %864 = vmatpush.msra.mxu0 %v270
    %865 = vmatpush.msra.mxu0 %v267
    %866 = vmatpush.msra.mxu0 %v264
    %867 = vmatmul.f32.gmra.mxu0 %v804
    %v868 = vpop.f32.mrf.mxu0
    %v869 = vadd.f32 0.0, %v868
    %870 = vdwg.mxu0
    %v871 = vadd.f32 %v806, %v829
    %v872 = vxor.u32 %v871, 2147483648
    %v873 = vmul.f32 %v872, 1.442695
    %v874 = vpow.pop %v873
    %v875 = vadd.f32 %v874, 1.0
    %v876 = vrcp.pop %v875
    %v877 = vmul.f32 %v875, %v876
    %v878 = vsub.f32 1.0, %v877
    %v879 = vmul.f32 %v876, %v878
    %v880 = vadd.f32 %v876, %v879
    %vm881 = vweird.f32 %v875
    %vm882 = vweird.f32 %v876
    %vm883 = vmor %vm881, %vm882
    %v884 = vsel %vm883, %v876, %v880
    %v885 = vand.u32 2147483647, %v875
    %vm886 = vcmp.eq.f32.partialorder %v885, 8.507059e+37
    %v887 = vand.u32 %v875, 2147483648
    %v888 = vor.u32 1.1754944e-38, %v887
    %v889 = vsel %vm886, %v888, %v884
    %v890 = vmul.f32 1.0, %v889
    %v891 = vadd.f32 %v807, %v849
    %v892 = vxor.u32 %v891, 2147483648
    %v893 = vmul.f32 %v892, 1.442695
    %v894 = vpow.pop %v893
    %v895 = vadd.f32 %v894, 1.0
    %v896 = vrcp.pop %v895
    %v897 = vmul.f32 %v895, %v896
    %v898 = vsub.f32 1.0, %v897
    %v899 = vmul.f32 %v896, %v898
    %v900 = vadd.f32 %v896, %v899
    %vm901 = vweird.f32 %v895
    %vm902 = vweird.f32 %v896
    %vm903 = vmor %vm901, %vm902
    %v904 = vsel %vm903, %v896, %v900
    %v905 = vand.u32 2147483647, %v895
    %vm906 = vcmp.eq.f32.partialorder %v905, 8.507059e+37
    %v907 = vand.u32 %v895, 2147483648
    %v908 = vor.u32 1.1754944e-38, %v907
    %v909 = vsel %vm906, %v908, %v904
    %v910 = vmul.f32 1.0, %v909
    %v911 = vadd.f32 %v869, %v312
    %v912 = vmul.f32 %v890, %v911
    %v913 = vadd.f32 %v808, %v912
    %v914 = vtanh.pop %v913
    %v915 = vsub.f32 %v804, %v914
    %v916 = vmul.f32 %v910, %v915
    %v917 = vadd.f32 %v914, %v916
    %919 = vset.pattern.permute.xlu0 0
    %920 = vperm.xlu0 %919, %v810
    %v921 = vpop.permute.xlu0 %920
    %v923 = vmul.f32 %v921, %v917
    %s924 = scalar_lea.vmem [#allocation3], 32
    %925 = vst [vmem:[%s924] sm:$0xff] %v923
    %v926 = vsub.f32 %v917, %v804
    %v927 = vmul.f32 %v921, %v926
    %v928 = vadd.f32 %v804, %v927
    %s929 = scalar_lea.vmem [#allocation2], 120
    %v930 = vld [vmem:[%s929] sm:$0xff]
    %v931 = vld [vmem:[%s929 + $0x8] sm:$0xff]
    %v932 = vld [vmem:[%s929 + $0x10] sm:$0xff]
    %s933 = scalar_lea.vmem %s1, 40
    %v934 = vld [vmem:[%s933] sm:$0xff]
    %935 = vmatpush.msra.mxu0 %v307
    %936 = vmatpush.msra.mxu0 %v304
    %937 = vmatpush.msra.mxu0 %v301
    %938 = vmatpush.msra.mxu0 %v298
    %939 = vmatpush.msra.mxu0 %v295
    %940 = vmatpush.msra.mxu0 %v292
    %941 = vmatpush.msra.mxu0 %v289
    %942 = vmatpush.msra.mxu0 %v286
    %943 = vmatpush.msra.mxu0 %v283
    %944 = vmatpush.msra.mxu0 %v280
    %945 = vmatpush.msra.mxu0 %v277
    %946 = vmatpush.msra.mxu0 %v274
    %947 = vmatpush.msra.mxu0 %v271
    %948 = vmatpush.msra.mxu0 %v268
    %949 = vmatpush.msra.mxu0 %v265
    %950 = vmatpush.msra.mxu0 %v262
    %951 = vmatmul.f32.gmra.mxu0 %v928
    %v952 = vpop.f32.mrf.mxu0
    %v953 = vadd.f32 0.0, %v952
    %954 = vdwg.mxu0
    %955 = vmatpush.msra.mxu0 %v308
    %956 = vmatpush.msra.mxu0 %v305
    %957 = vmatpush.msra.mxu0 %v302
    %958 = vmatpush.msra.mxu0 %v299
    %959 = vmatpush.msra.mxu0 %v296
    %960 = vmatpush.msra.mxu0 %v293
    %961 = vmatpush.msra.mxu0 %v290
    %962 = vmatpush.msra.mxu0 %v287
    %963 = vmatpush.msra.mxu0 %v284
    %964 = vmatpush.msra.mxu0 %v281
    %965 = vmatpush.msra.mxu0 %v278
    %966 = vmatpush.msra.mxu0 %v275
    %967 = vmatpush.msra.mxu0 %v272
    %968 = vmatpush.msra.mxu0 %v269
    %969 = vmatpush.msra.mxu0 %v266
    %970 = vmatpush.msra.mxu0 %v263
    %971 = vmatmul.f32.gmra.mxu0 %v928
    %v972 = vpop.f32.mrf.mxu0
    %v973 = vadd.f32 0.0, %v972
    %974 = vdwg.mxu0
    %975 = vmatpush.msra.mxu0 %v309
    %976 = vmatpush.msra.mxu0 %v306
    %977 = vmatpush.msra.mxu0 %v303
    %978 = vmatpush.msra.mxu0 %v300
    %979 = vmatpush.msra.mxu0 %v297
    %980 = vmatpush.msra.mxu0 %v294
    %981 = vmatpush.msra.mxu0 %v291
    %982 = vmatpush.msra.mxu0 %v288
    %983 = vmatpush.msra.mxu0 %v285
    %984 = vmatpush.msra.mxu0 %v282
    %985 = vmatpush.msra.mxu0 %v279
    %986 = vmatpush.msra.mxu0 %v276
    %987 = vmatpush.msra.mxu0 %v273
    %988 = vmatpush.msra.mxu0 %v270
    %989 = vmatpush.msra.mxu0 %v267
    %990 = vmatpush.msra.mxu0 %v264
    %991 = vmatmul.f32.gmra.mxu0 %v928
    %v992 = vpop.f32.mrf.mxu0
    %v993 = vadd.f32 0.0, %v992
    %994 = vdwg.mxu0
    %v995 = vadd.f32 %v930, %v953
    %v996 = vxor.u32 %v995, 2147483648
    %v997 = vmul.f32 %v996, 1.442695
    %v998 = vpow.pop %v997
    %v999 = vadd.f32 %v998, 1.0
    %v1000 = vrcp.pop %v999
    %v1001 = vmul.f32 %v999, %v1000
    %v1002 = vsub.f32 1.0, %v1001
    %v1003 = vmul.f32 %v1000, %v1002
    %v1004 = vadd.f32 %v1000, %v1003
    %vm1005 = vweird.f32 %v999
    %vm1006 = vweird.f32 %v1000
    %vm1007 = vmor %vm1005, %vm1006
    %v1008 = vsel %vm1007, %v1000, %v1004
    %v1009 = vand.u32 2147483647, %v999
    %vm1010 = vcmp.eq.f32.partialorder %v1009, 8.507059e+37
    %v1011 = vand.u32 %v999, 2147483648
    %v1012 = vor.u32 1.1754944e-38, %v1011
    %v1013 = vsel %vm1010, %v1012, %v1008
    %v1014 = vmul.f32 1.0, %v1013
    %v1015 = vadd.f32 %v931, %v973
    %v1016 = vxor.u32 %v1015, 2147483648
    %v1017 = vmul.f32 %v1016, 1.442695
    %v1018 = vpow.pop %v1017
    %v1019 = vadd.f32 %v1018, 1.0
    %v1020 = vrcp.pop %v1019
    %v1021 = vmul.f32 %v1019, %v1020
    %v1022 = vsub.f32 1.0, %v1021
    %v1023 = vmul.f32 %v1020, %v1022
    %v1024 = vadd.f32 %v1020, %v1023
    %vm1025 = vweird.f32 %v1019
    %vm1026 = vweird.f32 %v1020
    %vm1027 = vmor %vm1025, %vm1026
    %v1028 = vsel %vm1027, %v1020, %v1024
    %v1029 = vand.u32 2147483647, %v1019
    %vm1030 = vcmp.eq.f32.partialorder %v1029, 8.507059e+37
    %v1031 = vand.u32 %v1019, 2147483648
    %v1032 = vor.u32 1.1754944e-38, %v1031
    %v1033 = vsel %vm1030, %v1032, %v1028
    %v1034 = vmul.f32 1.0, %v1033
    %v1035 = vadd.f32 %v993, %v312
    %v1036 = vmul.f32 %v1014, %v1035
    %v1037 = vadd.f32 %v932, %v1036
    %v1038 = vtanh.pop %v1037
    %v1039 = vsub.f32 %v928, %v1038
    %v1040 = vmul.f32 %v1034, %v1039
    %v1041 = vadd.f32 %v1038, %v1040
    %1043 = vset.pattern.permute.xlu0 0
    %1044 = vperm.xlu0 %1043, %v934
    %v1045 = vpop.permute.xlu0 %1044
    %v1047 = vmul.f32 %v1045, %v1041
    %s1048 = scalar_lea.vmem [#allocation3], 40
    %1049 = vst [vmem:[%s1048] sm:$0xff] %v1047
    %v1050 = vsub.f32 %v1041, %v928
    %v1051 = vmul.f32 %v1045, %v1050
    %v1052 = vadd.f32 %v928, %v1051
    %s1053 = scalar_lea.vmem [#allocation2], 144
    %v1054 = vld [vmem:[%s1053] sm:$0xff]
    %v1055 = vld [vmem:[%s1053 + $0x8] sm:$0xff]
    %v1056 = vld [vmem:[%s1053 + $0x10] sm:$0xff]
    %s1057 = scalar_lea.vmem %s1, 48
    %v1058 = vld [vmem:[%s1057] sm:$0xff]
    %1059 = vmatpush.msra.mxu0 %v307
    %1060 = vmatpush.msra.mxu0 %v304
    %1061 = vmatpush.msra.mxu0 %v301
    %1062 = vmatpush.msra.mxu0 %v298
    %1063 = vmatpush.msra.mxu0 %v295
    %1064 = vmatpush.msra.mxu0 %v292
    %1065 = vmatpush.msra.mxu0 %v289
    %1066 = vmatpush.msra.mxu0 %v286
    %1067 = vmatpush.msra.mxu0 %v283
    %1068 = vmatpush.msra.mxu0 %v280
    %1069 = vmatpush.msra.mxu0 %v277
    %1070 = vmatpush.msra.mxu0 %v274
    %1071 = vmatpush.msra.mxu0 %v271
    %1072 = vmatpush.msra.mxu0 %v268
    %1073 = vmatpush.msra.mxu0 %v265
    %1074 = vmatpush.msra.mxu0 %v262
    %1075 = vmatmul.f32.gmra.mxu0 %v1052
    %v1076 = vpop.f32.mrf.mxu0
    %v1077 = vadd.f32 0.0, %v1076
    %1078 = vdwg.mxu0
    %1079 = vmatpush.msra.mxu0 %v308
    %1080 = vmatpush.msra.mxu0 %v305
    %1081 = vmatpush.msra.mxu0 %v302
    %1082 = vmatpush.msra.mxu0 %v299
    %1083 = vmatpush.msra.mxu0 %v296
    %1084 = vmatpush.msra.mxu0 %v293
    %1085 = vmatpush.msra.mxu0 %v290
    %1086 = vmatpush.msra.mxu0 %v287
    %1087 = vmatpush.msra.mxu0 %v284
    %1088 = vmatpush.msra.mxu0 %v281
    %1089 = vmatpush.msra.mxu0 %v278
    %1090 = vmatpush.msra.mxu0 %v275
    %1091 = vmatpush.msra.mxu0 %v272
    %1092 = vmatpush.msra.mxu0 %v269
    %1093 = vmatpush.msra.mxu0 %v266
    %1094 = vmatpush.msra.mxu0 %v263
    %1095 = vmatmul.f32.gmra.mxu0 %v1052
    %v1096 = vpop.f32.mrf.mxu0
    %v1097 = vadd.f32 0.0, %v1096
    %1098 = vdwg.mxu0
    %1099 = vmatpush.msra.mxu0 %v309
    %1100 = vmatpush.msra.mxu0 %v306
    %1101 = vmatpush.msra.mxu0 %v303
    %1102 = vmatpush.msra.mxu0 %v300
    %1103 = vmatpush.msra.mxu0 %v297
    %1104 = vmatpush.msra.mxu0 %v294
    %1105 = vmatpush.msra.mxu0 %v291
    %1106 = vmatpush.msra.mxu0 %v288
    %1107 = vmatpush.msra.mxu0 %v285
    %1108 = vmatpush.msra.mxu0 %v282
    %1109 = vmatpush.msra.mxu0 %v279
    %1110 = vmatpush.msra.mxu0 %v276
    %1111 = vmatpush.msra.mxu0 %v273
    %1112 = vmatpush.msra.mxu0 %v270
    %1113 = vmatpush.msra.mxu0 %v267
    %1114 = vmatpush.msra.mxu0 %v264
    %1115 = vmatmul.f32.gmra.mxu0 %v1052
    %v1116 = vpop.f32.mrf.mxu0
    %v1117 = vadd.f32 0.0, %v1116
    %1118 = vdwg.mxu0
    %v1119 = vadd.f32 %v1054, %v1077
    %v1120 = vxor.u32 %v1119, 2147483648
    %v1121 = vmul.f32 %v1120, 1.442695
    %v1122 = vpow.pop %v1121
    %v1123 = vadd.f32 %v1122, 1.0
    %v1124 = vrcp.pop %v1123
    %v1125 = vmul.f32 %v1123, %v1124
    %v1126 = vsub.f32 1.0, %v1125
    %v1127 = vmul.f32 %v1124, %v1126
    %v1128 = vadd.f32 %v1124, %v1127
    %vm1129 = vweird.f32 %v1123
    %vm1130 = vweird.f32 %v1124
    %vm1131 = vmor %vm1129, %vm1130
    %v1132 = vsel %vm1131, %v1124, %v1128
    %v1133 = vand.u32 2147483647, %v1123
    %vm1134 = vcmp.eq.f32.partialorder %v1133, 8.507059e+37
    %v1135 = vand.u32 %v1123, 2147483648
    %v1136 = vor.u32 1.1754944e-38, %v1135
    %v1137 = vsel %vm1134, %v1136, %v1132
    %v1138 = vmul.f32 1.0, %v1137
    %v1139 = vadd.f32 %v1055, %v1097
    %v1140 = vxor.u32 %v1139, 2147483648
    %v1141 = vmul.f32 %v1140, 1.442695
    %v1142 = vpow.pop %v1141
    %v1143 = vadd.f32 %v1142, 1.0
    %v1144 = vrcp.pop %v1143
    %v1145 = vmul.f32 %v1143, %v1144
    %v1146 = vsub.f32 1.0, %v1145
    %v1147 = vmul.f32 %v1144, %v1146
    %v1148 = vadd.f32 %v1144, %v1147
    %vm1149 = vweird.f32 %v1143
    %vm1150 = vweird.f32 %v1144
    %vm1151 = vmor %vm1149, %vm1150
    %v1152 = vsel %vm1151, %v1144, %v1148
    %v1153 = vand.u32 2147483647, %v1143
    %vm1154 = vcmp.eq.f32.partialorder %v1153, 8.507059e+37
    %v1155 = vand.u32 %v1143, 2147483648
    %v1156 = vor.u32 1.1754944e-38, %v1155
    %v1157 = vsel %vm1154, %v1156, %v1152
    %v1158 = vmul.f32 1.0, %v1157
    %v1159 = vadd.f32 %v1117, %v312
    %v1160 = vmul.f32 %v1138, %v1159
    %v1161 = vadd.f32 %v1056, %v1160
    %v1162 = vtanh.pop %v1161
    %v1163 = vsub.f32 %v1052, %v1162
    %v1164 = vmul.f32 %v1158, %v1163
    %v1165 = vadd.f32 %v1162, %v1164
    %1167 = vset.pattern.permute.xlu0 0
    %1168 = vperm.xlu0 %1167, %v1058
    %v1169 = vpop.permute.xlu0 %1168
    %v1171 = vmul.f32 %v1169, %v1165
    %s1172 = scalar_lea.vmem [#allocation3], 48
    %1173 = vst [vmem:[%s1172] sm:$0xff] %v1171
    %v1174 = vsub.f32 %v1165, %v1052
    %v1175 = vmul.f32 %v1169, %v1174
    %v1176 = vadd.f32 %v1052, %v1175
    %s1177 = scalar_lea.vmem [#allocation2], 168
    %v1178 = vld [vmem:[%s1177] sm:$0xff]
    %v1179 = vld [vmem:[%s1177 + $0x8] sm:$0xff]
    %v1180 = vld [vmem:[%s1177 + $0x10] sm:$0xff]
    %s1181 = scalar_lea.vmem %s1, 56
    %v1182 = vld [vmem:[%s1181] sm:$0xff]
    %1183 = vmatpush.msra.mxu0 %v307
    %1184 = vmatpush.msra.mxu0 %v304
    %1185 = vmatpush.msra.mxu0 %v301
    %1186 = vmatpush.msra.mxu0 %v298
    %1187 = vmatpush.msra.mxu0 %v295
    %1188 = vmatpush.msra.mxu0 %v292
    %1189 = vmatpush.msra.mxu0 %v289
    %1190 = vmatpush.msra.mxu0 %v286
    %1191 = vmatpush.msra.mxu0 %v283
    %1192 = vmatpush.msra.mxu0 %v280
    %1193 = vmatpush.msra.mxu0 %v277
    %1194 = vmatpush.msra.mxu0 %v274
    %1195 = vmatpush.msra.mxu0 %v271
    %1196 = vmatpush.msra.mxu0 %v268
    %1197 = vmatpush.msra.mxu0 %v265
    %1198 = vmatpush.msra.mxu0 %v262
    %1199 = vmatmul.f32.gmra.mxu0 %v1176
    %v1200 = vpop.f32.mrf.mxu0
    %v1201 = vadd.f32 0.0, %v1200
    %1202 = vdwg.mxu0
    %1203 = vmatpush.msra.mxu0 %v308
    %1204 = vmatpush.msra.mxu0 %v305
    %1205 = vmatpush.msra.mxu0 %v302
    %1206 = vmatpush.msra.mxu0 %v299
    %1207 = vmatpush.msra.mxu0 %v296
    %1208 = vmatpush.msra.mxu0 %v293
    %1209 = vmatpush.msra.mxu0 %v290
    %1210 = vmatpush.msra.mxu0 %v287
    %1211 = vmatpush.msra.mxu0 %v284
    %1212 = vmatpush.msra.mxu0 %v281
    %1213 = vmatpush.msra.mxu0 %v278
    %1214 = vmatpush.msra.mxu0 %v275
    %1215 = vmatpush.msra.mxu0 %v272
    %1216 = vmatpush.msra.mxu0 %v269
    %1217 = vmatpush.msra.mxu0 %v266
    %1218 = vmatpush.msra.mxu0 %v263
    %1219 = vmatmul.f32.gmra.mxu0 %v1176
    %v1220 = vpop.f32.mrf.mxu0
    %v1221 = vadd.f32 0.0, %v1220
    %1222 = vdwg.mxu0
    %1223 = vmatpush.msra.mxu0 %v309
    %1224 = vmatpush.msra.mxu0 %v306
    %1225 = vmatpush.msra.mxu0 %v303
    %1226 = vmatpush.msra.mxu0 %v300
    %1227 = vmatpush.msra.mxu0 %v297
    %1228 = vmatpush.msra.mxu0 %v294
    %1229 = vmatpush.msra.mxu0 %v291
    %1230 = vmatpush.msra.mxu0 %v288
    %1231 = vmatpush.msra.mxu0 %v285
    %1232 = vmatpush.msra.mxu0 %v282
    %1233 = vmatpush.msra.mxu0 %v279
    %1234 = vmatpush.msra.mxu0 %v276
    %1235 = vmatpush.msra.mxu0 %v273
    %1236 = vmatpush.msra.mxu0 %v270
    %1237 = vmatpush.msra.mxu0 %v267
    %1238 = vmatpush.msra.mxu0 %v264
    %1239 = vmatmul.f32.gmra.mxu0 %v1176
    %v1240 = vpop.f32.mrf.mxu0
    %v1241 = vadd.f32 0.0, %v1240
    %1242 = vdwg.mxu0
    %v1243 = vadd.f32 %v1178, %v1201
    %v1244 = vxor.u32 %v1243, 2147483648
    %v1245 = vmul.f32 %v1244, 1.442695
    %v1246 = vpow.pop %v1245
    %v1247 = vadd.f32 %v1246, 1.0
    %v1248 = vrcp.pop %v1247
    %v1249 = vmul.f32 %v1247, %v1248
    %v1250 = vsub.f32 1.0, %v1249
    %v1251 = vmul.f32 %v1248, %v1250
    %v1252 = vadd.f32 %v1248, %v1251
    %vm1253 = vweird.f32 %v1247
    %vm1254 = vweird.f32 %v1248
    %vm1255 = vmor %vm1253, %vm1254
    %v1256 = vsel %vm1255, %v1248, %v1252
    %v1257 = vand.u32 2147483647, %v1247
    %vm1258 = vcmp.eq.f32.partialorder %v1257, 8.507059e+37
    %v1259 = vand.u32 %v1247, 2147483648
    %v1260 = vor.u32 1.1754944e-38, %v1259
    %v1261 = vsel %vm1258, %v1260, %v1256
    %v1262 = vmul.f32 1.0, %v1261
    %v1263 = vadd.f32 %v1179, %v1221
    %v1264 = vxor.u32 %v1263, 2147483648
    %v1265 = vmul.f32 %v1264, 1.442695
    %v1266 = vpow.pop %v1265
    %v1267 = vadd.f32 %v1266, 1.0
    %v1268 = vrcp.pop %v1267
    %v1269 = vmul.f32 %v1267, %v1268
    %v1270 = vsub.f32 1.0, %v1269
    %v1271 = vmul.f32 %v1268, %v1270
    %v1272 = vadd.f32 %v1268, %v1271
    %vm1273 = vweird.f32 %v1267
    %vm1274 = vweird.f32 %v1268
    %vm1275 = vmor %vm1273, %vm1274
    %v1276 = vsel %vm1275, %v1268, %v1272
    %v1277 = vand.u32 2147483647, %v1267
    %vm1278 = vcmp.eq.f32.partialorder %v1277, 8.507059e+37
    %v1279 = vand.u32 %v1267, 2147483648
    %v1280 = vor.u32 1.1754944e-38, %v1279
    %v1281 = vsel %vm1278, %v1280, %v1276
    %v1282 = vmul.f32 1.0, %v1281
    %v1283 = vadd.f32 %v1241, %v312
    %v1284 = vmul.f32 %v1262, %v1283
    %v1285 = vadd.f32 %v1180, %v1284
    %v1286 = vtanh.pop %v1285
    %v1287 = vsub.f32 %v1176, %v1286
    %v1288 = vmul.f32 %v1282, %v1287
    %v1289 = vadd.f32 %v1286, %v1288
    %1291 = vset.pattern.permute.xlu0 0
    %1292 = vperm.xlu0 %1291, %v1182
    %v1293 = vpop.permute.xlu0 %1292
    %v1295 = vmul.f32 %v1293, %v1289
    %s1296 = scalar_lea.vmem [#allocation3], 56
    %1297 = vst [vmem:[%s1296] sm:$0xff] %v1295
    %v1298 = vsub.f32 %v1289, %v1176
    %v1299 = vmul.f32 %v1293, %v1298
    %v1300 = vadd.f32 %v1176, %v1299
    %v1301 = vld [vmem:[#allocation3] sm:$0xff]
    %v1302 = vld [vmem:[#allocation3 + $0x8] sm:$0xff]
    %v1303 = vld [vmem:[#allocation3 + $0x10] sm:$0xff]
    %v1304 = vld [vmem:[#allocation3 + $0x18] sm:$0xff]
    %v1305 = vld [vmem:[#allocation3 + $0x20] sm:$0xff]
    %v1306 = vld [vmem:[#allocation3 + $0x28] sm:$0xff]
    %v1307 = vld [vmem:[#allocation3 + $0x30] sm:$0xff]
    %v1308 = vld [vmem:[#allocation3 + $0x38] sm:$0xff]
    %v1309 = vld [vmem:[%s1] sm:$0xff]
    %v1310 = vld [vmem:[%s1 + $0x8] sm:$0xff]
    %v1311 = vld [vmem:[%s1 + $0x10] sm:$0xff]
    %v1312 = vld [vmem:[%s1 + $0x18] sm:$0xff]
    %v1313 = vld [vmem:[%s1 + $0x20] sm:$0xff]
    %v1314 = vld [vmem:[%s1 + $0x28] sm:$0xff]
    %v1315 = vld [vmem:[%s1 + $0x30] sm:$0xff]
    %v1316 = vld [vmem:[%s1 + $0x38] sm:$0xff]
    %v1317 = vld [vmem:[%s6] sm:$0xff]
    %v1318 = vld [vmem:[%s6 + $0x8] sm:$0xff]
    %v1319 = vld [vmem:[%s6 + $0x10] sm:$0xff]
    %v1320 = vld [vmem:[%s6 + $0x18] sm:$0xff]
    %v1321 = vld [vmem:[%s6 + $0x20] sm:$0xff]
    %v1322 = vld [vmem:[%s6 + $0x28] sm:$0xff]
    %v1323 = vld [vmem:[%s6 + $0x30] sm:$0xff]
    %v1324 = vld [vmem:[%s6 + $0x38] sm:$0xff]
    %v1325 = vld [vmem:[%s6 + $0x40] sm:$0xff]
    %v1326 = vld [vmem:[%s6 + $0x48] sm:$0xff]
    %v1327 = vld [vmem:[%s6 + $0x50] sm:$0xff]
    %v1328 = vld [vmem:[%s6 + $0x58] sm:$0xff]
    %v1329 = vld [vmem:[%s6 + $0x60] sm:$0xff]
    %v1330 = vld [vmem:[%s6 + $0x68] sm:$0xff]
    %v1331 = vld [vmem:[%s6 + $0x70] sm:$0xff]
    %v1332 = vld [vmem:[%s6 + $0x78] sm:$0xff]
    %1333 = vmatpush.msra.mxu0 %v1332
    %1334 = vmatpush.msra.mxu0 %v1331
    %1335 = vmatpush.msra.mxu0 %v1330
    %1336 = vmatpush.msra.mxu0 %v1329
    %1337 = vmatpush.msra.mxu0 %v1328
    %1338 = vmatpush.msra.mxu0 %v1327
    %1339 = vmatpush.msra.mxu0 %v1326
    %1340 = vmatpush.msra.mxu0 %v1325
    %1341 = vmatpush.msra.mxu0 %v1324
    %1342 = vmatpush.msra.mxu0 %v1323
    %1343 = vmatpush.msra.mxu0 %v1322
    %1344 = vmatpush.msra.mxu0 %v1321
    %1345 = vmatpush.msra.mxu0 %v1320
    %1346 = vmatpush.msra.mxu0 %v1319
    %1347 = vmatpush.msra.mxu0 %v1318
    %1348 = vmatpush.msra.mxu0 %v1317
    %1349 = vmatmul.f32.gmra.mxu0 %v1300
    %v1350 = vpop.f32.mrf.mxu0
    %v1351 = vadd.f32 0.0, %v1350
    %1352 = vdwg.mxu0
    %v1353 = vld [vmem:[%s7] sm:$0xff]
    %v1354 = vld [vmem:[%s7 + $0x8] sm:$0xff]
    %v1355 = vld [vmem:[%s7 + $0x10] sm:$0xff]
    %v1356 = vld [vmem:[%s7 + $0x18] sm:$0xff]
    %v1357 = vld [vmem:[%s7 + $0x20] sm:$0xff]
    %v1358 = vld [vmem:[%s7 + $0x28] sm:$0xff]
    %v1359 = vld [vmem:[%s7 + $0x30] sm:$0xff]
    %v1360 = vld [vmem:[%s7 + $0x38] sm:$0xff]
    %v1361 = vld [vmem:[%s7 + $0x40] sm:$0xff]
    %v1362 = vld [vmem:[%s7 + $0x48] sm:$0xff]
    %v1363 = vld [vmem:[%s7 + $0x50] sm:$0xff]
    %v1364 = vld [vmem:[%s7 + $0x58] sm:$0xff]
    %v1365 = vld [vmem:[%s7 + $0x60] sm:$0xff]
    %v1366 = vld [vmem:[%s7 + $0x68] sm:$0xff]
    %v1367 = vld [vmem:[%s7 + $0x70] sm:$0xff]
    %v1368 = vld [vmem:[%s7 + $0x78] sm:$0xff]
    %1369 = vmatpush.msra.mxu0 %v1368
    %1370 = vmatpush.msra.mxu0 %v1367
    %1371 = vmatpush.msra.mxu0 %v1366
    %1372 = vmatpush.msra.mxu0 %v1365
    %1373 = vmatpush.msra.mxu0 %v1364
    %1374 = vmatpush.msra.mxu0 %v1363
    %1375 = vmatpush.msra.mxu0 %v1362
    %1376 = vmatpush.msra.mxu0 %v1361
    %1377 = vmatpush.msra.mxu0 %v1360
    %1378 = vmatpush.msra.mxu0 %v1359
    %1379 = vmatpush.msra.mxu0 %v1358
    %1380 = vmatpush.msra.mxu0 %v1357
    %1381 = vmatpush.msra.mxu0 %v1356
    %1382 = vmatpush.msra.mxu0 %v1355
    %1383 = vmatpush.msra.mxu0 %v1354
    %1384 = vmatpush.msra.mxu0 %v1353
    %1385 = vmatmul.f32.gmra.mxu0 %v1301
    %v1386 = vpop.f32.mrf.mxu0
    %v1387 = vadd.f32 0.0, %v1386
    %1388 = vmatmul.f32.gmra.mxu0 %v1302
    %v1389 = vpop.f32.mrf.mxu0
    %v1390 = vadd.f32 0.0, %v1389
    %1391 = vmatmul.f32.gmra.mxu0 %v1303
    %v1392 = vpop.f32.mrf.mxu0
    %v1393 = vadd.f32 0.0, %v1392
    %1394 = vmatmul.f32.gmra.mxu0 %v1304
    %v1395 = vpop.f32.mrf.mxu0
    %v1396 = vadd.f32 0.0, %v1395
    %1397 = vmatmul.f32.gmra.mxu0 %v1305
    %v1398 = vpop.f32.mrf.mxu0
    %v1399 = vadd.f32 0.0, %v1398
    %1400 = vmatmul.f32.gmra.mxu0 %v1306
    %v1401 = vpop.f32.mrf.mxu0
    %v1402 = vadd.f32 0.0, %v1401
    %1403 = vmatmul.f32.gmra.mxu0 %v1307
    %v1404 = vpop.f32.mrf.mxu0
    %v1405 = vadd.f32 0.0, %v1404
    %1406 = vmatmul.f32.gmra.mxu0 %v1308
    %v1407 = vpop.f32.mrf.mxu0
    %v1408 = vadd.f32 0.0, %v1407
    %1409 = vdwg.mxu0
    %v1410 = vadd.f32 %v1351, %v1387
    %v1411 = vadd.f32 %v1351, %v1390
    %v1412 = vadd.f32 %v1351, %v1393
    %v1413 = vadd.f32 %v1351, %v1396
    %v1414 = vadd.f32 %v1351, %v1399
    %v1415 = vadd.f32 %v1351, %v1402
    %v1416 = vadd.f32 %v1351, %v1405
    %v1417 = vadd.f32 %v1351, %v1408
    %v1418 = vxor.u32 %v1410, 2147483648
    %v1419 = vxor.u32 %v1411, 2147483648
    %v1420 = vxor.u32 %v1412, 2147483648
    %v1421 = vxor.u32 %v1413, 2147483648
    %v1422 = vxor.u32 %v1414, 2147483648
    %v1423 = vxor.u32 %v1415, 2147483648
    %v1424 = vxor.u32 %v1416, 2147483648
    %v1425 = vxor.u32 %v1417, 2147483648
    %v1426 = vmul.f32 %v1418, 1.442695
    %v1427 = vpow.pop %v1426
    %v1428 = vmul.f32 %v1419, 1.442695
    %v1429 = vpow.pop %v1428
    %v1430 = vmul.f32 %v1420, 1.442695
    %v1431 = vpow.pop %v1430
    %v1432 = vmul.f32 %v1421, 1.442695
    %v1433 = vpow.pop %v1432
    %v1434 = vmul.f32 %v1422, 1.442695
    %v1435 = vpow.pop %v1434
    %v1436 = vmul.f32 %v1423, 1.442695
    %v1437 = vpow.pop %v1436
    %v1438 = vmul.f32 %v1424, 1.442695
    %v1439 = vpow.pop %v1438
    %v1440 = vmul.f32 %v1425, 1.442695
    %v1441 = vpow.pop %v1440
    %v1442 = vadd.f32 %v1427, 1.0
    %v1443 = vadd.f32 %v1429, 1.0
    %v1444 = vadd.f32 %v1431, 1.0
    %v1445 = vadd.f32 %v1433, 1.0
    %v1446 = vadd.f32 %v1435, 1.0
    %v1447 = vadd.f32 %v1437, 1.0
    %v1448 = vadd.f32 %v1439, 1.0
    %v1449 = vadd.f32 %v1441, 1.0
    %v1450 = vrcp.pop %v1442
    %v1451 = vmul.f32 %v1442, %v1450
    %v1452 = vsub.f32 1.0, %v1451
    %v1453 = vmul.f32 %v1450, %v1452
    %v1454 = vadd.f32 %v1450, %v1453
    %vm1455 = vweird.f32 %v1442
    %vm1456 = vweird.f32 %v1450
    %vm1457 = vmor %vm1455, %vm1456
    %v1458 = vsel %vm1457, %v1450, %v1454
    %v1459 = vand.u32 2147483647, %v1442
    %vm1460 = vcmp.eq.f32.partialorder %v1459, 8.507059e+37
    %v1461 = vand.u32 %v1442, 2147483648
    %v1462 = vor.u32 1.1754944e-38, %v1461
    %v1463 = vsel %vm1460, %v1462, %v1458
    %v1464 = vmul.f32 1.0, %v1463
    %v1465 = vrcp.pop %v1443
    %v1466 = vmul.f32 %v1443, %v1465
    %v1467 = vsub.f32 1.0, %v1466
    %v1468 = vmul.f32 %v1465, %v1467
    %v1469 = vadd.f32 %v1465, %v1468
    %vm1470 = vweird.f32 %v1443
    %vm1471 = vweird.f32 %v1465
    %vm1472 = vmor %vm1470, %vm1471
    %v1473 = vsel %vm1472, %v1465, %v1469
    %v1474 = vand.u32 2147483647, %v1443
    %vm1475 = vcmp.eq.f32.partialorder %v1474, 8.507059e+37
    %v1476 = vand.u32 %v1443, 2147483648
    %v1477 = vor.u32 1.1754944e-38, %v1476
    %v1478 = vsel %vm1475, %v1477, %v1473
    %v1479 = vmul.f32 1.0, %v1478
    %v1480 = vrcp.pop %v1444
    %v1481 = vmul.f32 %v1444, %v1480
    %v1482 = vsub.f32 1.0, %v1481
    %v1483 = vmul.f32 %v1480, %v1482
    %v1484 = vadd.f32 %v1480, %v1483
    %vm1485 = vweird.f32 %v1444
    %vm1486 = vweird.f32 %v1480
    %vm1487 = vmor %vm1485, %vm1486
    %v1488 = vsel %vm1487, %v1480, %v1484
    %v1489 = vand.u32 2147483647, %v1444
    %vm1490 = vcmp.eq.f32.partialorder %v1489, 8.507059e+37
    %v1491 = vand.u32 %v1444, 2147483648
    %v1492 = vor.u32 1.1754944e-38, %v1491
    %v1493 = vsel %vm1490, %v1492, %v1488
    %v1494 = vmul.f32 1.0, %v1493
    %v1495 = vrcp.pop %v1445
    %v1496 = vmul.f32 %v1445, %v1495
    %v1497 = vsub.f32 1.0, %v1496
    %v1498 = vmul.f32 %v1495, %v1497
    %v1499 = vadd.f32 %v1495, %v1498
    %vm1500 = vweird.f32 %v1445
    %vm1501 = vweird.f32 %v1495
    %vm1502 = vmor %vm1500, %vm1501
    %v1503 = vsel %vm1502, %v1495, %v1499
    %v1504 = vand.u32 2147483647, %v1445
    %vm1505 = vcmp.eq.f32.partialorder %v1504, 8.507059e+37
    %v1506 = vand.u32 %v1445, 2147483648
    %v1507 = vor.u32 1.1754944e-38, %v1506
    %v1508 = vsel %vm1505, %v1507, %v1503
    %v1509 = vmul.f32 1.0, %v1508
    %v1510 = vrcp.pop %v1446
    %v1511 = vmul.f32 %v1446, %v1510
    %v1512 = vsub.f32 1.0, %v1511
    %v1513 = vmul.f32 %v1510, %v1512
    %v1514 = vadd.f32 %v1510, %v1513
    %vm1515 = vweird.f32 %v1446
    %vm1516 = vweird.f32 %v1510
    %vm1517 = vmor %vm1515, %vm1516
    %v1518 = vsel %vm1517, %v1510, %v1514
    %v1519 = vand.u32 2147483647, %v1446
    %vm1520 = vcmp.eq.f32.partialorder %v1519, 8.507059e+37
    %v1521 = vand.u32 %v1446, 2147483648
    %v1522 = vor.u32 1.1754944e-38, %v1521
    %v1523 = vsel %vm1520, %v1522, %v1518
    %v1524 = vmul.f32 1.0, %v1523
    %v1525 = vrcp.pop %v1447
    %v1526 = vmul.f32 %v1447, %v1525
    %v1527 = vsub.f32 1.0, %v1526
    %v1528 = vmul.f32 %v1525, %v1527
    %v1529 = vadd.f32 %v1525, %v1528
    %vm1530 = vweird.f32 %v1447
    %vm1531 = vweird.f32 %v1525
    %vm1532 = vmor %vm1530, %vm1531
    %v1533 = vsel %vm1532, %v1525, %v1529
    %v1534 = vand.u32 2147483647, %v1447
    %vm1535 = vcmp.eq.f32.partialorder %v1534, 8.507059e+37
    %v1536 = vand.u32 %v1447, 2147483648
    %v1537 = vor.u32 1.1754944e-38, %v1536
    %v1538 = vsel %vm1535, %v1537, %v1533
    %v1539 = vmul.f32 1.0, %v1538
    %v1540 = vrcp.pop %v1448
    %v1541 = vmul.f32 %v1448, %v1540
    %v1542 = vsub.f32 1.0, %v1541
    %v1543 = vmul.f32 %v1540, %v1542
    %v1544 = vadd.f32 %v1540, %v1543
    %vm1545 = vweird.f32 %v1448
    %vm1546 = vweird.f32 %v1540
    %vm1547 = vmor %vm1545, %vm1546
    %v1548 = vsel %vm1547, %v1540, %v1544
    %v1549 = vand.u32 2147483647, %v1448
    %vm1550 = vcmp.eq.f32.partialorder %v1549, 8.507059e+37
    %v1551 = vand.u32 %v1448, 2147483648
    %v1552 = vor.u32 1.1754944e-38, %v1551
    %v1553 = vsel %vm1550, %v1552, %v1548
    %v1554 = vmul.f32 1.0, %v1553
    %v1555 = vrcp.pop %v1449
    %v1556 = vmul.f32 %v1449, %v1555
    %v1557 = vsub.f32 1.0, %v1556
    %v1558 = vmul.f32 %v1555, %v1557
    %v1559 = vadd.f32 %v1555, %v1558
    %vm1560 = vweird.f32 %v1449
    %vm1561 = vweird.f32 %v1555
    %vm1562 = vmor %vm1560, %vm1561
    %v1563 = vsel %vm1562, %v1555, %v1559
    %v1564 = vand.u32 2147483647, %v1449
    %vm1565 = vcmp.eq.f32.partialorder %v1564, 8.507059e+37
    %v1566 = vand.u32 %v1449, 2147483648
    %v1567 = vor.u32 1.1754944e-38, %v1566
    %v1568 = vsel %vm1565, %v1567, %v1563
    %v1569 = vmul.f32 1.0, %v1568
    %v1570 = vld [vmem:[%s8] sm:$0x1]
    %v1572 = vperm.slane %v1570, 0
    %v1574 = vmul.f32 %v1464, %v1572
    %v1575 = vmul.f32 %v1479, %v1572
    %v1576 = vmul.f32 %v1494, %v1572
    %v1577 = vmul.f32 %v1509, %v1572
    %v1578 = vmul.f32 %v1524, %v1572
    %v1579 = vmul.f32 %v1539, %v1572
    %v1580 = vmul.f32 %v1554, %v1572
    %v1581 = vmul.f32 %v1569, %v1572
    %1582 = vadd.xlane.f32.xlu0 %v1574
    %v1583 = vpop.xlane.xlu0 %1582
    %1584 = vadd.xlane.f32.xlu0 %v1575
    %v1585 = vpop.xlane.xlu0 %1584
    %1586 = vadd.xlane.f32.xlu0 %v1576
    %v1587 = vpop.xlane.xlu0 %1586
    %1588 = vadd.xlane.f32.xlu0 %v1577
    %v1589 = vpop.xlane.xlu0 %1588
    %1590 = vadd.xlane.f32.xlu0 %v1578
    %v1591 = vpop.xlane.xlu0 %1590
    %1592 = vadd.xlane.f32.xlu0 %v1579
    %v1593 = vpop.xlane.xlu0 %1592
    %1594 = vadd.xlane.f32.xlu0 %v1580
    %v1595 = vpop.xlane.xlu0 %1594
    %1596 = vadd.xlane.f32.xlu0 %v1581
    %v1597 = vpop.xlane.xlu0 %1596
    %vm1598 = vcmask 7168
    %v1599 = vsel %vm1598, %v1309, 0.0
    %v1600 = vsel %vm1598, %v1310, 0.0
    %v1601 = vadd.f32 %v1599, %v1600
    %v1602 = vsel %vm1598, %v1311, 0.0
    %v1603 = vadd.f32 %v1601, %v1602
    %v1604 = vsel %vm1598, %v1312, 0.0
    %v1605 = vadd.f32 %v1603, %v1604
    %v1606 = vsel %vm1598, %v1313, 0.0
    %v1607 = vadd.f32 %v1605, %v1606
    %v1608 = vsel %vm1598, %v1314, 0.0
    %v1609 = vadd.f32 %v1607, %v1608
    %v1610 = vsel %vm1598, %v1315, 0.0
    %v1611 = vadd.f32 %v1609, %v1610
    %v1612 = vsel %vm1598, %v1316, 0.0
    %v1613 = vadd.f32 %v1611, %v1612
    %vm1614 = vcmp.gt.f32.partialorder %v1613, 0.0
    %vm1615 = vcmp.gt.f32.partialorder %v1309, 0.0
    %vm1616 = vcmp.gt.f32.partialorder %v1310, 0.0
    %vm1617 = vcmp.gt.f32.partialorder %v1311, 0.0
    %vm1618 = vcmp.gt.f32.partialorder %v1312, 0.0
    %vm1619 = vcmp.gt.f32.partialorder %v1313, 0.0
    %vm1620 = vcmp.gt.f32.partialorder %v1314, 0.0
    %vm1621 = vcmp.gt.f32.partialorder %v1315, 0.0
    %vm1622 = vcmp.gt.f32.partialorder %v1316, 0.0
    %v1623 = vsel %vm1615, %v1583, -1e+30
    %v1624 = vsel %vm1616, %v1585, -1e+30
    %v1625 = vsel %vm1617, %v1587, -1e+30
    %v1626 = vsel %vm1618, %v1589, -1e+30
    %v1627 = vsel %vm1619, %v1591, -1e+30
    %v1628 = vsel %vm1620, %v1593, -1e+30
    %v1629 = vsel %vm1621, %v1595, -1e+30
    %v1630 = vsel %vm1622, %v1597, -1e+30
    %v1631 = vsel %vm1598, %v1623, -inf
    %v1632 = vsel %vm1598, %v1624, -inf
    %v1633 = vsel %vm1598, %v1625, -inf
    %v1634 = vsel %vm1598, %v1626, -inf
    %v1635 = vsel %vm1598, %v1627, -inf
    %v1636 = vmax.f32 %v1631, %v1635
    %v1637 = vsel %vm1598, %v1628, -inf
    %v1638 = vmax.f32 %v1632, %v1637
    %v1639 = vsel %vm1598, %v1629, -inf
    %v1640 = vmax.f32 %v1633, %v1639
    %v1641 = vsel %vm1598, %v1630, -inf
    %v1642 = vmax.f32 %v1634, %v1641
    %v1643 = vmax.f32 %v1636, %v1638
    %v1644 = vmax.f32 %v1640, %v1642
    %v1645 = vmax.f32 %v1643, %v1644
    %v1646 = vsel %vm1614, %v1645, 0.0
    %v1647 = vsub.f32 %v1583, %v1646
    %v1648 = vsub.f32 %v1585, %v1646
    %v1649 = vsub.f32 %v1587, %v1646
    %v1650 = vsub.f32 %v1589, %v1646
    %v1651 = vsub.f32 %v1591, %v1646
    %v1652 = vsub.f32 %v1593, %v1646
    %v1653 = vsub.f32 %v1595, %v1646
    %v1654 = vsub.f32 %v1597, %v1646
    %v1655 = vsel %vm1615, %v1647, -1e+30
    %v1656 = vsel %vm1616, %v1648, -1e+30
    %v1657 = vsel %vm1617, %v1649, -1e+30
    %v1658 = vsel %vm1618, %v1650, -1e+30
    %v1659 = vsel %vm1619, %v1651, -1e+30
    %v1660 = vsel %vm1620, %v1652, -1e+30
    %v1661 = vsel %vm1621, %v1653, -1e+30
    %v1662 = vsel %vm1622, %v1654, -1e+30
    %v1663 = vmul.f32 %v1655, 1.442695
    %v1664 = vpow.pop %v1663
    %v1665 = vmul.f32 %v1656, 1.442695
    %v1666 = vpow.pop %v1665
    %v1667 = vmul.f32 %v1657, 1.442695
    %v1668 = vpow.pop %v1667
    %v1669 = vmul.f32 %v1658, 1.442695
    %v1670 = vpow.pop %v1669
    %v1671 = vmul.f32 %v1659, 1.442695
    %v1672 = vpow.pop %v1671
    %v1673 = vmul.f32 %v1660, 1.442695
    %v1674 = vpow.pop %v1673
    %v1675 = vmul.f32 %v1661, 1.442695
    %v1676 = vpow.pop %v1675
    %v1677 = vmul.f32 %v1662, 1.442695
    %v1678 = vpow.pop %v1677
    %v1679 = vsel %vm1598, %v1664, 0.0
    %v1680 = vsel %vm1598, %v1666, 0.0
    %v1681 = vadd.f32 %v1679, %v1680
    %v1682 = vsel %vm1598, %v1668, 0.0
    %v1683 = vadd.f32 %v1681, %v1682
    %v1684 = vsel %vm1598, %v1670, 0.0
    %v1685 = vadd.f32 %v1683, %v1684
    %v1686 = vsel %vm1598, %v1672, 0.0
    %v1687 = vadd.f32 %v1685, %v1686
    %v1688 = vsel %vm1598, %v1674, 0.0
    %v1689 = vadd.f32 %v1687, %v1688
    %v1690 = vsel %vm1598, %v1676, 0.0
    %v1691 = vadd.f32 %v1689, %v1690
    %v1692 = vsel %vm1598, %v1678, 0.0
    %v1693 = vadd.f32 %v1691, %v1692
    %v1694 = vsel %vm1614, %v1693, 1.0
    %v1695 = vrcp.pop %v1694
    %v1696 = vmul.f32 %v1694, %v1695
    %v1697 = vsub.f32 1.0, %v1696
    %v1698 = vmul.f32 %v1695, %v1697
    %v1699 = vadd.f32 %v1695, %v1698
    %vm1700 = vweird.f32 %v1694
    %vm1701 = vweird.f32 %v1695
    %vm1702 = vmor %vm1700, %vm1701
    %v1703 = vsel %vm1702, %v1695, %v1699
    %v1704 = vand.u32 2147483647, %v1694
    %vm1705 = vcmp.eq.f32.partialorder %v1704, 8.507059e+37
    %v1706 = vand.u32 %v1694, 2147483648
    %v1707 = vor.u32 1.1754944e-38, %v1706
    %v1708 = vsel %vm1705, %v1707, %v1703
    %v1709 = vmul.f32 %v1664, %v1708
    %v1710 = vmul.f32 %v1666, %v1708
    %v1711 = vmul.f32 %v1668, %v1708
    %v1712 = vmul.f32 %v1670, %v1708
    %v1713 = vmul.f32 %v1672, %v1708
    %v1714 = vmul.f32 %v1674, %v1708
    %v1715 = vmul.f32 %v1676, %v1708
    %v1716 = vmul.f32 %v1678, %v1708
    %1718 = vset.pattern.permute.xlu0 0
    %1719 = vperm.xlu0 %1718, %v1709
    %v1720 = vpop.permute.xlu0 %1719
    %1723 = vset.pattern.permute.xlu0 0
    %1724 = vperm.xlu0 %1723, %v1710
    %v1725 = vpop.permute.xlu0 %1724
    %1728 = vset.pattern.permute.xlu0 0
    %1729 = vperm.xlu0 %1728, %v1711
    %v1730 = vpop.permute.xlu0 %1729
    %1733 = vset.pattern.permute.xlu0 0
    %1734 = vperm.xlu0 %1733, %v1712
    %v1735 = vpop.permute.xlu0 %1734
    %1738 = vset.pattern.permute.xlu0 0
    %1739 = vperm.xlu0 %1738, %v1713
    %v1740 = vpop.permute.xlu0 %1739
    %1743 = vset.pattern.permute.xlu0 0
    %1744 = vperm.xlu0 %1743, %v1714
    %v1745 = vpop.permute.xlu0 %1744
    %1748 = vset.pattern.permute.xlu0 0
    %1749 = vperm.xlu0 %1748, %v1715
    %v1750 = vpop.permute.xlu0 %1749
    %1753 = vset.pattern.permute.xlu0 0
    %1754 = vperm.xlu0 %1753, %v1716
    %v1755 = vpop.permute.xlu0 %1754
    %v1757 = vmul.f32 %v1720, %v1301
    %v1758 = vmul.f32 %v1725, %v1302
    %v1759 = vmul.f32 %v1730, %v1303
    %v1760 = vmul.f32 %v1735, %v1304
    %v1761 = vmul.f32 %v1740, %v1305
    %v1762 = vmul.f32 %v1745, %v1306
    %v1763 = vmul.f32 %v1750, %v1307
    %v1764 = vmul.f32 %v1755, %v1308
    %v1765 = vadd.f32 %v1757, %v1758
    %v1766 = vadd.f32 %v1765, %v1759
    %v1767 = vadd.f32 %v1766, %v1760
    %v1768 = vadd.f32 %v1767, %v1761
    %v1769 = vadd.f32 %v1768, %v1762
    %v1770 = vadd.f32 %v1769, %v1763
    %v1771 = vadd.f32 %v1770, %v1764
    %v1772 = vld [vmem:[%s9] sm:$0xff]
    %v1773 = vld [vmem:[%s9 + $0x8] sm:$0xff]
    %v1774 = vld [vmem:[%s9 + $0x10] sm:$0xff]
    %v1775 = vld [vmem:[%s9 + $0x18] sm:$0xff]
    %v1776 = vld [vmem:[%s9 + $0x20] sm:$0xff]
    %v1777 = vld [vmem:[%s9 + $0x28] sm:$0xff]
    %v1778 = vld [vmem:[%s9 + $0x30] sm:$0xff]
    %v1779 = vld [vmem:[%s9 + $0x38] sm:$0xff]
    %v1780 = vld [vmem:[%s9 + $0x40] sm:$0xff]
    %v1781 = vld [vmem:[%s9 + $0x48] sm:$0xff]
    %v1782 = vld [vmem:[%s9 + $0x50] sm:$0xff]
    %v1783 = vld [vmem:[%s9 + $0x58] sm:$0xff]
    %v1784 = vld [vmem:[%s9 + $0x60] sm:$0xff]
    %v1785 = vld [vmem:[%s9 + $0x68] sm:$0xff]
    %v1786 = vld [vmem:[%s9 + $0x70] sm:$0xff]
    %v1787 = vld [vmem:[%s9 + $0x78] sm:$0xff]
    %v1788 = vld [vmem:[%s9 + $0x80] sm:$0xff]
    %v1789 = vld [vmem:[%s9 + $0x88] sm:$0xff]
    %v1790 = vld [vmem:[%s9 + $0x90] sm:$0xff]
    %v1791 = vld [vmem:[%s9 + $0x98] sm:$0xff]
    %v1792 = vld [vmem:[%s9 + $0xa0] sm:$0xff]
    %v1793 = vld [vmem:[%s9 + $0xa8] sm:$0xff]
    %v1794 = vld [vmem:[%s9 + $0xb0] sm:$0xff]
    %v1795 = vld [vmem:[%s9 + $0xb8] sm:$0xff]
    %v1796 = vld [vmem:[%s9 + $0xc0] sm:$0xff]
    %v1797 = vld [vmem:[%s9 + $0xc8] sm:$0xff]
    %v1798 = vld [vmem:[%s9 + $0xd0] sm:$0xff]
    %v1799 = vld [vmem:[%s9 + $0xd8] sm:$0xff]
    %v1800 = vld [vmem:[%s9 + $0xe0] sm:$0xff]
    %v1801 = vld [vmem:[%s9 + $0xe8] sm:$0xff]
    %v1802 = vld [vmem:[%s9 + $0xf0] sm:$0xff]
    %v1803 = vld [vmem:[%s9 + $0xf8] sm:$0xff]
    %1804 = vmatpush.msra.mxu0 %v1787
    %1805 = vmatpush.msra.mxu0 %v1786
    %1806 = vmatpush.msra.mxu0 %v1785
    %1807 = vmatpush.msra.mxu0 %v1784
    %1808 = vmatpush.msra.mxu0 %v1783
    %1809 = vmatpush.msra.mxu0 %v1782
    %1810 = vmatpush.msra.mxu0 %v1781
    %1811 = vmatpush.msra.mxu0 %v1780
    %1812 = vmatpush.msra.mxu0 %v1779
    %1813 = vmatpush.msra.mxu0 %v1778
    %1814 = vmatpush.msra.mxu0 %v1777
    %1815 = vmatpush.msra.mxu0 %v1776
    %1816 = vmatpush.msra.mxu0 %v1775
    %1817 = vmatpush.msra.mxu0 %v1774
    %1818 = vmatpush.msra.mxu0 %v1773
    %1819 = vmatpush.msra.mxu0 %v1772
    %1820 = vmatmul.f32.gmra.mxu0 %v1300
    %v1821 = vpop.f32.mrf.mxu0
    %v1822 = vadd.f32 0.0, %v1821
    %1823 = vdwg.mxu0
    %1824 = vmatpush.msra.mxu0 %v1803
    %1825 = vmatpush.msra.mxu0 %v1802
    %1826 = vmatpush.msra.mxu0 %v1801
    %1827 = vmatpush.msra.mxu0 %v1800
    %1828 = vmatpush.msra.mxu0 %v1799
    %1829 = vmatpush.msra.mxu0 %v1798
    %1830 = vmatpush.msra.mxu0 %v1797
    %1831 = vmatpush.msra.mxu0 %v1796
    %1832 = vmatpush.msra.mxu0 %v1795
    %1833 = vmatpush.msra.mxu0 %v1794
    %1834 = vmatpush.msra.mxu0 %v1793
    %1835 = vmatpush.msra.mxu0 %v1792
    %1836 = vmatpush.msra.mxu0 %v1791
    %1837 = vmatpush.msra.mxu0 %v1790
    %1838 = vmatpush.msra.mxu0 %v1789
    %1839 = vmatpush.msra.mxu0 %v1788
    %1840 = vmatmul.f32.gmra.mxu0 %v1771
    %v1841 = vpop.f32.mrf.mxu0
    %v1842 = vadd.f32 %v1822, %v1841
    %1843 = vdwg.mxu0
    %1844 = vst.msk [vmem:[#allocation9] sm:$0xff] %vm90, %v1842
    // Predicated region
    $region50: #{tpu_custom_call.1} parent=1 // pred_check
      _
    $region51: #{tpu_custom_call.1} parent=1 // pred_check_branch
      %1846 = sbr.rel (0) target = $region53
    $region52: #{tpu_custom_call.1} parent=1 // pred_region
      %1848 = vsyncadd [#allocation6], 0
      %s1850 = sshll.u32 [#allocation9], 4
      %s1851 = int_to_ptr.vmem [resolvable:$true] %s1850
      %s1852 = sshll.u32 %s10, 4
      %s1853 = int_to_ptr.hbm [resolvable:$true] %s1852
      %1855 = dma.vmem_to_hbm [thread:$0]  %s1851, 128, %s1853, [#allocation6]
    $region53: #{tpu_custom_call.1} parent=1 // pred_fallthru
      _
    // Predicated region
    $region54: #{tpu_custom_call.1} parent=1 // pred_check
      _
    $region55: #{tpu_custom_call.1} parent=1 // pred_check_branch
      %1857 = sbr.rel (0) target = $region57
    $region56: #{tpu_custom_call.1} parent=1 // pred_region
      %1859 = dma.done [#allocation6], 128
    $region57: #{tpu_custom_call.1} parent=1 // pred_fallthru
      _
    %1860 = vsyncpa [#allocation5], 1
    %1861 = vsyncpa [#allocation8], 1
    %1862 = vsyncpa [#allocation6], 1

</llo_original>
